<compile_context>
chip_gen: v6e
topology: v6e:2x2x1
jax: 0.10.0
libtpu: 0.0.40
codegen_flags: <defaults>
</compile_context>

<pallas_src>
import functools

import jax
import jax.numpy as jnp
from jax.experimental import pallas as pl
from jax.experimental.pallas import tpu as pltpu


# ----------------------------------------------------------------------------------
# Pallas kernel: the entire RecombinationBlock forward, lane-dense (N*H, W*C) layout.
# ----------------------------------------------------------------------------------
def _recombination_kernel(
    x_ref,        # (R, Kin)      f32  input, lane-dense (N*H, pad(W*Cin))
    row_h_ref,    # (R, WC)       i32  image-row index h for every row (r = n*H + h)
    w_exp_ref,    # (Kin, WC)     bf16 expansion 1x1 conv, block-diag kron(I_W, w)
    b_exp_ref,    # (1, WC)       f32
    gamma_ref,    # (1, WC)       f32  BatchNorm affine (tiled per W)
    beta_ref,     # (1, WC)       f32
    bn_red_ref,   # (WC, C)       f32  sums the W lane-groups -> per-channel totals
    bn_bc_ref,    # (C, WC)       f32  broadcasts per-channel stats back to lane-dense
    w_norm_ref,   # (3, WC, WC)   bf16 norm_conv per-ky banded slabs (dx taps + W-edge pad folded)
    b_norm_ref,   # (1, WC)       f32
    w_dila_ref,   # (3, WC, WHf)  bf16 SegSE dila_conv per-ky banded slabs (dilation 2)
    b_dila_ref,   # (1, WHf)      f32
    w_se1_ref,    # (WHf, WC)     bf16 SegSE 1x1 conv
    b_se1_ref,    # (1, WC)       f32
    w_zoom_ref,   # (WC, WO)      bf16 zoom 1x1 conv
    w_skip_ref,   # (Kin, WO)     bf16 skip 1x1 conv
    b_out_ref,    # (1, WO)       f32  b_zoom + b_skip (tiled)
    out_ref,      # (R, WO)       f32
    *,
    img_h: int,   # H
    inv_p: float, # 1 / (N*H*W)
):
    f32, bf16 = jnp.float32, jnp.bfloat16

    x = x_ref[...]
    x_b = x.astype(bf16)
    row_h = row_h_ref[...]

    def shifted_rows(v, dy):
        # Row r of the result holds v[r + dy] when image-row h + dy stays inside the same image,
        # else 0 (the conv's zero padding along H).  pltpu.roll follows jnp.roll semantics.
        rolled = pltpu.roll(v, shift=(-dy) % v.shape[0], axis=0)
        valid = jnp.logical_and(row_h + dy >= 0, row_h + dy < img_h)
        return jnp.where(valid, rolled, 0.0)

    # ---- expansion_conv (1x1): one lane-dense matmul (bf16 operands, f32 accumulation) -------
    xe = jnp.dot(x_b, w_exp_ref[...], preferred_element_type=f32) + b_exp_ref[...]

    # ---- BatchNorm2d (training-mode biased batch stats over N, H, W); all stats in f32 -------
    def channel_stat(v):
        s = jnp.sum(v, axis=0, keepdims=True)                           # reduce rows (N*H)
        s = jnp.dot(s, bn_red_ref[...], preferred_element_type=f32)     # reduce the W lane-groups
        return jnp.dot(s, bn_bc_ref[...], preferred_element_type=f32) * inv_p   # re-broadcast

    mean = channel_stat(xe)
    diff = xe - mean
    var = channel_stat(diff * diff)
    xn = diff * jax.lax.rsqrt(var + 1e-5) * gamma_ref[...] + beta_ref[...]

    # ---- ReLU6 --------------------------------------------------------------------------------
    xr = jnp.clip(xn, 0.0, 6.0)

    # ---- norm_conv: 3x3, pad=1.  dy taps via roll+mask, dx taps + W-edge pad folded into the
    #      banded slabs; split-slab accumulation (no patch concatenation). ----------------------
    xc = (jnp.dot(shifted_rows(xr, -1).astype(bf16), w_norm_ref[0], preferred_element_type=f32)
          + jnp.dot(xr.astype(bf16), w_norm_ref[1], preferred_element_type=f32)
          + jnp.dot(shifted_rows(xr, 1).astype(bf16), w_norm_ref[2], preferred_element_type=f32)
          + b_norm_ref[...])

    # ---- SegSEBlock: dilated 3x3 (dil=2, pad=2) -> 1x1 -> sigmoid -------------------------------
    se = (jnp.dot(shifted_rows(xc, -2).astype(bf16), w_dila_ref[0], preferred_element_type=f32)
          + jnp.dot(xc.astype(bf16), w_dila_ref[1], preferred_element_type=f32)
          + jnp.dot(shifted_rows(xc, 2).astype(bf16), w_dila_ref[2], preferred_element_type=f32)
          + b_dila_ref[...])
    se = jnp.dot(se.astype(bf16), w_se1_ref[...], preferred_element_type=f32) + b_se1_ref[...]
    se = jax.nn.sigmoid(se)

    # ---- gate, then zoom_conv + skip_conv + residual add (two dots + add, no concat) ------------
    gated = (xc * se).astype(bf16)
    out_ref[...] = (jnp.dot(gated, w_zoom_ref[...], preferred_element_type=f32)
                    + jnp.dot(x_b, w_skip_ref[...], preferred_element_type=f32)
                    + b_out_ref[...])


# ----------------------------------------------------------------------------------
# One-time precompute of the lane-dense weights (pure JAX, outside the kernel).
# ----------------------------------------------------------------------------------
def make_dense_params(params, W):
    f32, bf16 = jnp.float32, jnp.bfloat16
    Cin = params["w_exp"].shape[0]
    Cexp = params["w_exp"].shape[1]
    Kin = ((W * Cin + 127) // 128) * 128      # pad input lane width to a full lane tile
    eye_w = jnp.eye(W, dtype=f32)

    def kron_eye(w):                           # 1x1 conv -> block-diagonal lane-dense weight
        return jnp.kron(eye_w, w.astype(f32))

    def tile_vec(v):                           # (1, C) -> (1, W*C)
        return jnp.tile(v.astype(f32), (1, W))

    def banded(w_taps, dil):
        # w_taps: (3, ci, co) for dx in (-dil, 0, +dil).  Builds the (W*ci, W*co) matrix with
        # block[w_in, w_out] = w_taps[dx] iff w_in == w_out + dx (W edges -> zero padding).
        ci, co = w_taps.shape[1], w_taps.shape[2]
        blocks = jnp.zeros((W, W, ci, co), f32)
        for t, dx in enumerate((-dil, 0, dil)):
            w_out = jnp.arange(max(0, -dx), min(W, W - dx))
            blocks = blocks.at[w_out + dx, w_out].set(w_taps[t].astype(f32))
        return blocks.transpose(0, 2, 1, 3).reshape(W * ci, W * co)

    def conv_weight(w9, dil):
        # w9: (9, ci, co), index ky*3+kx -> (3, W*ci, W*co) per-ky slabs (ky-major), consumed by
        # the split-slab accumulation [x(h-d) @ W0 + x(h) @ W1 + x(h+d) @ W2] in the kernel.
        return jnp.stack([banded(w9[3 * k:3 * k + 3], dil) for k in range(3)]).astype(bf16)

    w_exp_d = jnp.pad(kron_eye(params["w_exp"]), ((0, Kin - W * Cin), (0, 0))).astype(bf16)
    w_skip_d = jnp.pad(kron_eye(params["w_skip"]), ((0, Kin - W * Cin), (0, 0))).astype(bf16)

    return dict(
        w_exp=w_exp_d,
        b_exp=tile_vec(params["b_exp"]),
        gamma=tile_vec(params["gamma"]),
        beta=tile_vec(params["beta"]),
        bn_reduce=jnp.tile(jnp.eye(Cexp, dtype=f32), (W, 1)),   # (W*Cexp, Cexp)
        bn_bcast=jnp.tile(jnp.eye(Cexp, dtype=f32), (1, W)),    # (Cexp, W*Cexp)
        w_norm=conv_weight(params["w_norm"], 1),
        b_norm=tile_vec(params["b_norm"]),
        w_dila=conv_weight(params["w_dila"], 2),
        b_dila=tile_vec(params["b_dila"]),
        w_se1=kron_eye(params["w_se1"]).astype(bf16),
        b_se1=tile_vec(params["b_se1"]),
        w_zoom=kron_eye(params["w_zoom"]).astype(bf16),
        w_skip=w_skip_d,
        b_out=tile_vec(params["b_zoom"] + params["b_skip"]),
    )


# ----------------------------------------------------------------------------------
# Jitted apply: pack x lane-dense, call the Pallas kernel, unpack to NHWC.
# ----------------------------------------------------------------------------------
@jax.jit
def recombination_block(x_nhwc, dense):
    N, H, W, Cin = x_nhwc.shape
    WC = dense["gamma"].shape[1]
    WHf = dense["b_dila"].shape[1]
    WO = dense["b_out"].shape[1]
    Kin = dense["w_exp"].shape[0]
    Cexp = dense["bn_reduce"].shape[1]
    Cout = WO // W
    R, P = N * H, N * H * W

    x_d = x_nhwc.astype(jnp.float32).reshape(R, W * Cin)
    x_d = jnp.pad(x_d, ((0, 0), (0, Kin - W * Cin)))
    row_h = jnp.tile((jnp.arange(R, dtype=jnp.int32) % H)[:, None], (1, WC))

    operands = (
        x_d, row_h,
        dense["w_exp"], dense["b_exp"], dense["gamma"], dense["beta"],
        dense["bn_reduce"], dense["bn_bcast"],
        dense["w_norm"], dense["b_norm"],
        dense["w_dila"], dense["b_dila"],
        dense["w_se1"], dense["b_se1"],
        dense["w_zoom"], dense["w_skip"], dense["b_out"],
    )

    total_bytes = int(sum(a.size * a.dtype.itemsize for a in operands) + R * WO * 4)
    flops = int(
        2 * R * Kin * WC            # expansion 1x1
        + 2 * 4 * WC * Cexp         # BatchNorm reduce/broadcast matmuls (mean + var)
        + 3 * 2 * R * WC * WC       # norm_conv, 3 dy slabs
        + 3 * 2 * R * WC * WHf      # dila_conv, 3 dy slabs
        + 2 * R * WHf * WC          # SegSE 1x1
        + 2 * R * WC * WO           # zoom 1x1
        + 2 * R * Kin * WO)         # skip 1x1
    transcendentals = int(R * WC + WC)   # sigmoid + rsqrt

    kernel = functools.partial(_recombination_kernel, img_h=H, inv_p=1.0 / P)
    out_d = pl.pallas_call(
        kernel,
        out_shape=jax.ShapeDtypeStruct((R, WO), jnp.float32),
        in_specs=[pl.BlockSpec(memory_space=pltpu.MemorySpace.VMEM)] * len(operands),
        out_specs=pl.BlockSpec(memory_space=pltpu.MemorySpace.VMEM),
        compiler_params=pltpu.CompilerParams(vmem_limit_bytes=32 << 20),
        cost_estimate=pl.CostEstimate(flops=flops, transcendentals=transcendentals,
                                      bytes_accessed=total_bytes),
    )(*operands)
    # Lane-dense (N*H, W*Cout) -> NHWC; pure layout plumbing outside the kernel.
    return out_d.reshape(N, H, W, Cout)


# ----------------------------------------------------------------------------------
# Pure-JAX reference (mirrors the PyTorch forward, in NHWC, f32).
# ----------------------------------------------------------------------------------
def reference(x, p):
    dn = ("NHWC", "HWIO", "NHWC")
    conv1x1 = lambda v, w, b: jnp.einsum("nhwc,co->nhwo", v, w) + b

    xe = conv1x1(x, p["w_exp"], p["b_exp"])
    mean = jnp.mean(xe, axis=(0, 1, 2), keepdims=True)
    var = jnp.mean((xe - mean) ** 2, axis=(0, 1, 2), keepdims=True)
    xn = (xe - mean) / jnp.sqrt(var + 1e-5) * p["gamma"] + p["beta"]
    xr = jnp.clip(xn, 0.0, 6.0)

    Cexp = p["w_exp"].shape[1]
    Chalf = p["w_dila"].shape[2]
    w_norm_hwio = p["w_norm"].reshape(3, 3, Cexp, Cexp)
    w_dila_hwio = p["w_dila"].reshape(3, 3, Cexp, Chalf)

    xc = jax.lax.conv_general_dilated(xr, w_norm_hwio, (1, 1), [(1, 1), (1, 1)],
                                      dimension_numbers=dn) + p["b_norm"]
    se = jax.lax.conv_general_dilated(xc, w_dila_hwio, (1, 1), [(2, 2), (2, 2)],
                                      rhs_dilation=(2, 2),
                                      dimension_numbers=dn) + p["b_dila"]
    se = jax.nn.sigmoid(conv1x1(se, p["w_se1"], p["b_se1"]))
    xg = xc * se
    xz = conv1x1(xg, p["w_zoom"], p["b_zoom"])
    sk = conv1x1(x, p["w_skip"], p["b_skip"])
    return xz + sk


# ----------------------------------------------------------------------------------
# Main
# ----------------------------------------------------------------------------------
if __name__ == "__main__":
    # Small shapes consistent with the module: NCHW (2, 4, 16, 16) -> NHWC (2, 16, 16, 4)
    N, Cin, H, W = 2, 4, 16, 16
    Cout = 8
    rate = 2
    Cexp = Cout * rate          # expan_channels = out_channels * 2 = 16
    Chalf = Cexp // rate        # SegSE squeeze channels = 8

    key = jax.random.PRNGKey(0)
    ks = jax.random.split(key, 16)

    def init(k, shape, fan_in):
        return jax.random.normal(k, shape, jnp.float32) / jnp.sqrt(float(fan_in))

    params = {
        "w_exp":  init(ks[0], (Cin, Cexp), Cin),
        "b_exp":  init(ks[1], (1, Cexp), Cin),
        "gamma":  1.0 + 0.1 * jax.random.normal(ks[2], (1, Cexp), jnp.float32),
        "beta":   0.1 * jax.random.normal(ks[3], (1, Cexp), jnp.float32),
        "w_norm": init(ks[4], (9, Cexp, Cexp), 9 * Cexp),
        "b_norm": init(ks[5], (1, Cexp), 9 * Cexp),
        "w_dila": init(ks[6], (9, Cexp, Chalf), 9 * Cexp),
        "b_dila": init(ks[7], (1, Chalf), 9 * Cexp),
        "w_se1":  init(ks[8], (Chalf, Cexp), Chalf),
        "b_se1":  init(ks[9], (1, Cexp), Chalf),
        "w_zoom": init(ks[10], (Cexp, Cout), Cexp),
        "b_zoom": init(ks[11], (1, Cout), Cexp),
        "w_skip": init(ks[12], (Cin, Cout), Cin),
        "b_skip": init(ks[13], (1, Cout), Cin),
    }

    x_nchw = jax.random.normal(ks[14], (N, Cin, H, W), jnp.float32)
    x_nhwc = jnp.transpose(x_nchw, (0, 2, 3, 1))

    # Dense (kron / banded) weights are built once; the jitted apply reuses them per call.
    dense = make_dense_params(params, W)
    out = jax.block_until_ready(recombination_block(x_nhwc, dense))
    ref = jax.block_until_ready(reference(x_nhwc, params))

    assert out.shape == (N, H, W, Cout)
    max_err = float(jnp.max(jnp.abs(out - ref)))
    # bf16 MXU operands (f32 accumulation) vs an f32 reference -> bf16-appropriate tolerance;
    # structural errors (wrong taps / masks / stats) would be O(1) and still get caught.
    assert jnp.allclose(out, ref, rtol=2e-2, atol=2e-2), f"max abs err {max_err}"
    print("KERNEL_OK")
</pallas_src>

<mosaic_0001>
module attributes {stable_mosaic.version = 11 : i64} {
  func.func @_recombination_kernel(%arg0: memref<32x128xf32, #tpu.memory_space<vmem>>, %arg1: memref<32x256xi32, #tpu.memory_space<vmem>>, %arg2: memref<128x256xbf16, #tpu.memory_space<vmem>>, %arg3: memref<1x256xf32, #tpu.memory_space<vmem>>, %arg4: memref<1x256xf32, #tpu.memory_space<vmem>>, %arg5: memref<1x256xf32, #tpu.memory_space<vmem>>, %arg6: memref<256x16xf32, #tpu.memory_space<vmem>>, %arg7: memref<16x256xf32, #tpu.memory_space<vmem>>, %arg8: memref<3x256x256xbf16, #tpu.memory_space<vmem>>, %arg9: memref<1x256xf32, #tpu.memory_space<vmem>>, %arg10: memref<3x256x128xbf16, #tpu.memory_space<vmem>>, %arg11: memref<1x128xf32, #tpu.memory_space<vmem>>, %arg12: memref<128x256xbf16, #tpu.memory_space<vmem>>, %arg13: memref<1x256xf32, #tpu.memory_space<vmem>>, %arg14: memref<256x128xbf16, #tpu.memory_space<vmem>>, %arg15: memref<128x128xbf16, #tpu.memory_space<vmem>>, %arg16: memref<1x128xf32, #tpu.memory_space<vmem>>, %arg17: memref<32x128xf32, #tpu.memory_space<vmem>>) attributes {dimension_semantics = [], scalar_prefetch = 0 : i64, scratch_operands = 0 : i64, tpu.core_type = #tpu.core_type<tc>} {
    %c0 = arith.constant 0 : index
    %c0_0 = arith.constant 0 : index
    %0 = vector.load %arg0[%c0, %c0_0] : memref<32x128xf32, #tpu.memory_space<vmem>>, vector<32x128xf32>
    %1 = arith.truncf %0 : vector<32x128xf32> to vector<32x128xbf16>
    %c0_1 = arith.constant 0 : index
    %c0_2 = arith.constant 0 : index
    %2 = vector.load %arg1[%c0_1, %c0_2] : memref<32x256xi32, #tpu.memory_space<vmem>>, vector<32x256xi32>
    %c0_3 = arith.constant 0 : index
    %c0_4 = arith.constant 0 : index
    %3 = vector.load %arg2[%c0_3, %c0_4] : memref<128x256xbf16, #tpu.memory_space<vmem>>, vector<128x256xbf16>
    %cst = arith.constant dense<0.000000e+00> : vector<32x256xf32>
    %4 = tpu.matmul %1, %3, %cst {dimension_numbers = #tpu.dot_dimension_numbers<[1], [0], [0], [1], [0, 0, 1, 1], [], []>} : vector<32x128xbf16>, vector<128x256xbf16>, vector<32x256xf32> -> vector<32x256xf32>
    %c0_5 = arith.constant 0 : index
    %c0_6 = arith.constant 0 : index
    %5 = vector.load %arg3[%c0_5, %c0_6] : memref<1x256xf32, #tpu.memory_space<vmem>>, vector<1x256xf32>
    %6 = vector.broadcast %5 : vector<1x256xf32> to vector<32x256xf32>
    %7 = arith.addf %4, %6 : vector<32x256xf32>
    %cst_7 = arith.constant dense<0.000000e+00> : vector<256xf32>
    %8 = vector.multi_reduction <add>, %7, %cst_7 [0] : vector<32x256xf32> to vector<256xf32>
    %9 = vector.shape_cast %8 : vector<256xf32> to vector<1x256xf32>
    %c0_8 = arith.constant 0 : index
    %c0_9 = arith.constant 0 : index
    %10 = vector.load %arg6[%c0_8, %c0_9] : memref<256x16xf32, #tpu.memory_space<vmem>>, vector<256x16xf32>
    %cst_10 = arith.constant dense<0.000000e+00> : vector<1x16xf32>
    %11 = tpu.matmul %9, %10, %cst_10 {dimension_numbers = #tpu.dot_dimension_numbers<[1], [0], [0], [1], [0, 0, 1, 1], [], []>} : vector<1x256xf32>, vector<256x16xf32>, vector<1x16xf32> -> vector<1x16xf32>
    %c0_11 = arith.constant 0 : index
    %c0_12 = arith.constant 0 : index
    %12 = vector.load %arg7[%c0_11, %c0_12] : memref<16x256xf32, #tpu.memory_space<vmem>>, vector<16x256xf32>
    %cst_13 = arith.constant dense<0.000000e+00> : vector<1x256xf32>
    %13 = tpu.matmul %11, %12, %cst_13 {dimension_numbers = #tpu.dot_dimension_numbers<[1], [0], [0], [1], [0, 0, 1, 1], [], []>} : vector<1x16xf32>, vector<16x256xf32>, vector<1x256xf32> -> vector<1x256xf32>
    %cst_14 = arith.constant 0.001953125 : f32
    %14 = vector.broadcast %cst_14 : f32 to vector<1x256xf32>
    %15 = arith.mulf %13, %14 : vector<1x256xf32>
    %16 = vector.broadcast %15 : vector<1x256xf32> to vector<32x256xf32>
    %17 = arith.subf %7, %16 : vector<32x256xf32>
    %18 = arith.mulf %17, %17 : vector<32x256xf32>
    %cst_15 = arith.constant dense<0.000000e+00> : vector<256xf32>
    %19 = vector.multi_reduction <add>, %18, %cst_15 [0] : vector<32x256xf32> to vector<256xf32>
    %20 = vector.shape_cast %19 : vector<256xf32> to vector<1x256xf32>
    %c0_16 = arith.constant 0 : index
    %c0_17 = arith.constant 0 : index
    %21 = vector.load %arg6[%c0_16, %c0_17] : memref<256x16xf32, #tpu.memory_space<vmem>>, vector<256x16xf32>
    %cst_18 = arith.constant dense<0.000000e+00> : vector<1x16xf32>
    %22 = tpu.matmul %20, %21, %cst_18 {dimension_numbers = #tpu.dot_dimension_numbers<[1], [0], [0], [1], [0, 0, 1, 1], [], []>} : vector<1x256xf32>, vector<256x16xf32>, vector<1x16xf32> -> vector<1x16xf32>
    %c0_19 = arith.constant 0 : index
    %c0_20 = arith.constant 0 : index
    %23 = vector.load %arg7[%c0_19, %c0_20] : memref<16x256xf32, #tpu.memory_space<vmem>>, vector<16x256xf32>
    %cst_21 = arith.constant dense<0.000000e+00> : vector<1x256xf32>
    %24 = tpu.matmul %22, %23, %cst_21 {dimension_numbers = #tpu.dot_dimension_numbers<[1], [0], [0], [1], [0, 0, 1, 1], [], []>} : vector<1x16xf32>, vector<16x256xf32>, vector<1x256xf32> -> vector<1x256xf32>
    %cst_22 = arith.constant 0.001953125 : f32
    %25 = vector.broadcast %cst_22 : f32 to vector<1x256xf32>
    %26 = arith.mulf %24, %25 : vector<1x256xf32>
    %cst_23 = arith.constant 9.99999974E-6 : f32
    %27 = vector.broadcast %cst_23 : f32 to vector<1x256xf32>
    %28 = arith.addf %26, %27 : vector<1x256xf32>
    %29 = math.rsqrt %28 : vector<1x256xf32>
    %30 = vector.broadcast %29 : vector<1x256xf32> to vector<32x256xf32>
    %31 = arith.mulf %17, %30 : vector<32x256xf32>
    %c0_24 = arith.constant 0 : index
    %c0_25 = arith.constant 0 : index
    %32 = vector.load %arg4[%c0_24, %c0_25] : memref<1x256xf32, #tpu.memory_space<vmem>>, vector<1x256xf32>
    %33 = vector.broadcast %32 : vector<1x256xf32> to vector<32x256xf32>
    %34 = arith.mulf %31, %33 : vector<32x256xf32>
    %c0_26 = arith.constant 0 : index
    %c0_27 = arith.constant 0 : index
    %35 = vector.load %arg5[%c0_26, %c0_27] : memref<1x256xf32, #tpu.memory_space<vmem>>, vector<1x256xf32>
    %36 = vector.broadcast %35 : vector<1x256xf32> to vector<32x256xf32>
    %37 = arith.addf %34, %36 : vector<32x256xf32>
    %cst_28 = arith.constant 0.000000e+00 : f32
    %cst_29 = arith.constant 6.000000e+00 : f32
    %38 = vector.broadcast %cst_28 : f32 to vector<32x256xf32>
    %39 = arith.maximumf %38, %37 : vector<32x256xf32>
    %40 = vector.broadcast %cst_29 : f32 to vector<32x256xf32>
    %41 = arith.minimumf %40, %39 : vector<32x256xf32>
    %c1_i32 = arith.constant 1 : i32
    %42 = tpu.dynamic_rotate %41 by %c1_i32 dim 0 : vector<32x256xf32>, i32 -> vector<32x256xf32>
    %c-1_i32 = arith.constant -1 : i32
    %43 = vector.broadcast %c-1_i32 : i32 to vector<32x256xi32>
    %44 = arith.addi %2, %43 : vector<32x256xi32>
    %c0_i32 = arith.constant 0 : i32
    %45 = vector.broadcast %c0_i32 : i32 to vector<32x256xi32>
    %46 = arith.cmpi sge, %44, %45 : vector<32x256xi32>
    %c-1_i32_30 = arith.constant -1 : i32
    %47 = vector.broadcast %c-1_i32_30 : i32 to vector<32x256xi32>
    %48 = arith.addi %2, %47 : vector<32x256xi32>
    %c16_i32 = arith.constant 16 : i32
    %49 = vector.broadcast %c16_i32 : i32 to vector<32x256xi32>
    %50 = arith.cmpi slt, %48, %49 : vector<32x256xi32>
    %51 = arith.andi %46, %50 : vector<32x256xi1>
    %cst_31 = arith.constant 0.000000e+00 : f32
    %52 = vector.broadcast %cst_31 : f32 to vector<32x256xf32>
    %53 = arith.select %51, %42, %52 : vector<32x256xi1>, vector<32x256xf32>
    %54 = arith.truncf %53 : vector<32x256xf32> to vector<32x256xbf16>
    %c0_32 = arith.constant 0 : index
    %c0_33 = arith.constant 0 : index
    %c0_34 = arith.constant 0 : index
    %55 = vector.load %arg8[%c0_32, %c0_33, %c0_34] : memref<3x256x256xbf16, #tpu.memory_space<vmem>>, vector<1x256x256xbf16>
    %56 = vector.shape_cast %55 : vector<1x256x256xbf16> to vector<256x256xbf16>
    %cst_35 = arith.constant dense<0.000000e+00> : vector<32x256xf32>
    %57 = tpu.matmul %54, %56, %cst_35 {dimension_numbers = #tpu.dot_dimension_numbers<[1], [0], [0], [1], [0, 0, 1, 1], [], []>} : vector<32x256xbf16>, vector<256x256xbf16>, vector<32x256xf32> -> vector<32x256xf32>
    %58 = arith.truncf %41 : vector<32x256xf32> to vector<32x256xbf16>
    %c1 = arith.constant 1 : index
    %c0_36 = arith.constant 0 : index
    %c0_37 = arith.constant 0 : index
    %59 = vector.load %arg8[%c1, %c0_36, %c0_37] : memref<3x256x256xbf16, #tpu.memory_space<vmem>>, vector<1x256x256xbf16>
    %60 = vector.shape_cast %59 : vector<1x256x256xbf16> to vector<256x256xbf16>
    %cst_38 = arith.constant dense<0.000000e+00> : vector<32x256xf32>
    %61 = tpu.matmul %58, %60, %cst_38 {dimension_numbers = #tpu.dot_dimension_numbers<[1], [0], [0], [1], [0, 0, 1, 1], [], []>} : vector<32x256xbf16>, vector<256x256xbf16>, vector<32x256xf32> -> vector<32x256xf32>
    %62 = arith.addf %57, %61 : vector<32x256xf32>
    %c31_i32 = arith.constant 31 : i32
    %63 = tpu.dynamic_rotate %41 by %c31_i32 dim 0 : vector<32x256xf32>, i32 -> vector<32x256xf32>
    %c1_i32_39 = arith.constant 1 : i32
    %64 = vector.broadcast %c1_i32_39 : i32 to vector<32x256xi32>
    %65 = arith.addi %2, %64 : vector<32x256xi32>
    %c0_i32_40 = arith.constant 0 : i32
    %66 = vector.broadcast %c0_i32_40 : i32 to vector<32x256xi32>
    %67 = arith.cmpi sge, %65, %66 : vector<32x256xi32>
    %c1_i32_41 = arith.constant 1 : i32
    %68 = vector.broadcast %c1_i32_41 : i32 to vector<32x256xi32>
    %69 = arith.addi %2, %68 : vector<32x256xi32>
    %c16_i32_42 = arith.constant 16 : i32
    %70 = vector.broadcast %c16_i32_42 : i32 to vector<32x256xi32>
    %71 = arith.cmpi slt, %69, %70 : vector<32x256xi32>
    %72 = arith.andi %67, %71 : vector<32x256xi1>
    %cst_43 = arith.constant 0.000000e+00 : f32
    %73 = vector.broadcast %cst_43 : f32 to vector<32x256xf32>
    %74 = arith.select %72, %63, %73 : vector<32x256xi1>, vector<32x256xf32>
    %75 = arith.truncf %74 : vector<32x256xf32> to vector<32x256xbf16>
    %c2 = arith.constant 2 : index
    %c0_44 = arith.constant 0 : index
    %c0_45 = arith.constant 0 : index
    %76 = vector.load %arg8[%c2, %c0_44, %c0_45] : memref<3x256x256xbf16, #tpu.memory_space<vmem>>, vector<1x256x256xbf16>
    %77 = vector.shape_cast %76 : vector<1x256x256xbf16> to vector<256x256xbf16>
    %cst_46 = arith.constant dense<0.000000e+00> : vector<32x256xf32>
    %78 = tpu.matmul %75, %77, %cst_46 {dimension_numbers = #tpu.dot_dimension_numbers<[1], [0], [0], [1], [0, 0, 1, 1], [], []>} : vector<32x256xbf16>, vector<256x256xbf16>, vector<32x256xf32> -> vector<32x256xf32>
    %79 = arith.addf %62, %78 : vector<32x256xf32>
    %c0_47 = arith.constant 0 : index
    %c0_48 = arith.constant 0 : index
    %80 = vector.load %arg9[%c0_47, %c0_48] : memref<1x256xf32, #tpu.memory_space<vmem>>, vector<1x256xf32>
    %81 = vector.broadcast %80 : vector<1x256xf32> to vector<32x256xf32>
    %82 = arith.addf %79, %81 : vector<32x256xf32>
    %c2_i32 = arith.constant 2 : i32
    %83 = tpu.dynamic_rotate %82 by %c2_i32 dim 0 : vector<32x256xf32>, i32 -> vector<32x256xf32>
    %c-2_i32 = arith.constant -2 : i32
    %84 = vector.broadcast %c-2_i32 : i32 to vector<32x256xi32>
    %85 = arith.addi %2, %84 : vector<32x256xi32>
    %c0_i32_49 = arith.constant 0 : i32
    %86 = vector.broadcast %c0_i32_49 : i32 to vector<32x256xi32>
    %87 = arith.cmpi sge, %85, %86 : vector<32x256xi32>
    %c-2_i32_50 = arith.constant -2 : i32
    %88 = vector.broadcast %c-2_i32_50 : i32 to vector<32x256xi32>
    %89 = arith.addi %2, %88 : vector<32x256xi32>
    %c16_i32_51 = arith.constant 16 : i32
    %90 = vector.broadcast %c16_i32_51 : i32 to vector<32x256xi32>
    %91 = arith.cmpi slt, %89, %90 : vector<32x256xi32>
    %92 = arith.andi %87, %91 : vector<32x256xi1>
    %cst_52 = arith.constant 0.000000e+00 : f32
    %93 = vector.broadcast %cst_52 : f32 to vector<32x256xf32>
    %94 = arith.select %92, %83, %93 : vector<32x256xi1>, vector<32x256xf32>
    %95 = arith.truncf %94 : vector<32x256xf32> to vector<32x256xbf16>
    %c0_53 = arith.constant 0 : index
    %c0_54 = arith.constant 0 : index
    %c0_55 = arith.constant 0 : index
    %96 = vector.load %arg10[%c0_53, %c0_54, %c0_55] : memref<3x256x128xbf16, #tpu.memory_space<vmem>>, vector<1x256x128xbf16>
    %97 = vector.shape_cast %96 : vector<1x256x128xbf16> to vector<256x128xbf16>
    %cst_56 = arith.constant dense<0.000000e+00> : vector<32x128xf32>
    %98 = tpu.matmul %95, %97, %cst_56 {dimension_numbers = #tpu.dot_dimension_numbers<[1], [0], [0], [1], [0, 0, 1, 1], [], []>} : vector<32x256xbf16>, vector<256x128xbf16>, vector<32x128xf32> -> vector<32x128xf32>
    %99 = arith.truncf %82 : vector<32x256xf32> to vector<32x256xbf16>
    %c1_57 = arith.constant 1 : index
    %c0_58 = arith.constant 0 : index
    %c0_59 = arith.constant 0 : index
    %100 = vector.load %arg10[%c1_57, %c0_58, %c0_59] : memref<3x256x128xbf16, #tpu.memory_space<vmem>>, vector<1x256x128xbf16>
    %101 = vector.shape_cast %100 : vector<1x256x128xbf16> to vector<256x128xbf16>
    %cst_60 = arith.constant dense<0.000000e+00> : vector<32x128xf32>
    %102 = tpu.matmul %99, %101, %cst_60 {dimension_numbers = #tpu.dot_dimension_numbers<[1], [0], [0], [1], [0, 0, 1, 1], [], []>} : vector<32x256xbf16>, vector<256x128xbf16>, vector<32x128xf32> -> vector<32x128xf32>
    %103 = arith.addf %98, %102 : vector<32x128xf32>
    %c30_i32 = arith.constant 30 : i32
    %104 = tpu.dynamic_rotate %82 by %c30_i32 dim 0 : vector<32x256xf32>, i32 -> vector<32x256xf32>
    %c2_i32_61 = arith.constant 2 : i32
    %105 = vector.broadcast %c2_i32_61 : i32 to vector<32x256xi32>
    %106 = arith.addi %2, %105 : vector<32x256xi32>
    %c0_i32_62 = arith.constant 0 : i32
    %107 = vector.broadcast %c0_i32_62 : i32 to vector<32x256xi32>
    %108 = arith.cmpi sge, %106, %107 : vector<32x256xi32>
    %c2_i32_63 = arith.constant 2 : i32
    %109 = vector.broadcast %c2_i32_63 : i32 to vector<32x256xi32>
    %110 = arith.addi %2, %109 : vector<32x256xi32>
    %c16_i32_64 = arith.constant 16 : i32
    %111 = vector.broadcast %c16_i32_64 : i32 to vector<32x256xi32>
    %112 = arith.cmpi slt, %110, %111 : vector<32x256xi32>
    %113 = arith.andi %108, %112 : vector<32x256xi1>
    %cst_65 = arith.constant 0.000000e+00 : f32
    %114 = vector.broadcast %cst_65 : f32 to vector<32x256xf32>
    %115 = arith.select %113, %104, %114 : vector<32x256xi1>, vector<32x256xf32>
    %116 = arith.truncf %115 : vector<32x256xf32> to vector<32x256xbf16>
    %c2_66 = arith.constant 2 : index
    %c0_67 = arith.constant 0 : index
    %c0_68 = arith.constant 0 : index
    %117 = vector.load %arg10[%c2_66, %c0_67, %c0_68] : memref<3x256x128xbf16, #tpu.memory_space<vmem>>, vector<1x256x128xbf16>
    %118 = vector.shape_cast %117 : vector<1x256x128xbf16> to vector<256x128xbf16>
    %cst_69 = arith.constant dense<0.000000e+00> : vector<32x128xf32>
    %119 = tpu.matmul %116, %118, %cst_69 {dimension_numbers = #tpu.dot_dimension_numbers<[1], [0], [0], [1], [0, 0, 1, 1], [], []>} : vector<32x256xbf16>, vector<256x128xbf16>, vector<32x128xf32> -> vector<32x128xf32>
    %120 = arith.addf %103, %119 : vector<32x128xf32>
    %c0_70 = arith.constant 0 : index
    %c0_71 = arith.constant 0 : index
    %121 = vector.load %arg11[%c0_70, %c0_71] : memref<1x128xf32, #tpu.memory_space<vmem>>, vector<1x128xf32>
    %122 = vector.broadcast %121 : vector<1x128xf32> to vector<32x128xf32>
    %123 = arith.addf %120, %122 : vector<32x128xf32>
    %124 = arith.truncf %123 : vector<32x128xf32> to vector<32x128xbf16>
    %c0_72 = arith.constant 0 : index
    %c0_73 = arith.constant 0 : index
    %125 = vector.load %arg12[%c0_72, %c0_73] : memref<128x256xbf16, #tpu.memory_space<vmem>>, vector<128x256xbf16>
    %cst_74 = arith.constant dense<0.000000e+00> : vector<32x256xf32>
    %126 = tpu.matmul %124, %125, %cst_74 {dimension_numbers = #tpu.dot_dimension_numbers<[1], [0], [0], [1], [0, 0, 1, 1], [], []>} : vector<32x128xbf16>, vector<128x256xbf16>, vector<32x256xf32> -> vector<32x256xf32>
    %c0_75 = arith.constant 0 : index
    %c0_76 = arith.constant 0 : index
    %127 = vector.load %arg13[%c0_75, %c0_76] : memref<1x256xf32, #tpu.memory_space<vmem>>, vector<1x256xf32>
    %128 = vector.broadcast %127 : vector<1x256xf32> to vector<32x256xf32>
    %129 = arith.addf %126, %128 : vector<32x256xf32>
    %130 = arith.negf %129 : vector<32x256xf32>
    %131 = math.exp %130 : vector<32x256xf32>
    %cst_77 = arith.constant 1.000000e+00 : f32
    %132 = vector.broadcast %cst_77 : f32 to vector<32x256xf32>
    %133 = arith.addf %132, %131 : vector<32x256xf32>
    %134 = arith.divf %132, %133 : vector<32x256xf32>
    %135 = arith.mulf %82, %134 : vector<32x256xf32>
    %136 = arith.truncf %135 : vector<32x256xf32> to vector<32x256xbf16>
    %c0_78 = arith.constant 0 : index
    %c0_79 = arith.constant 0 : index
    %137 = vector.load %arg14[%c0_78, %c0_79] : memref<256x128xbf16, #tpu.memory_space<vmem>>, vector<256x128xbf16>
    %cst_80 = arith.constant dense<0.000000e+00> : vector<32x128xf32>
    %138 = tpu.matmul %136, %137, %cst_80 {dimension_numbers = #tpu.dot_dimension_numbers<[1], [0], [0], [1], [0, 0, 1, 1], [], []>} : vector<32x256xbf16>, vector<256x128xbf16>, vector<32x128xf32> -> vector<32x128xf32>
    %c0_81 = arith.constant 0 : index
    %c0_82 = arith.constant 0 : index
    %139 = vector.load %arg15[%c0_81, %c0_82] : memref<128x128xbf16, #tpu.memory_space<vmem>>, vector<128x128xbf16>
    %cst_83 = arith.constant dense<0.000000e+00> : vector<32x128xf32>
    %140 = tpu.matmul %1, %139, %cst_83 {dimension_numbers = #tpu.dot_dimension_numbers<[1], [0], [0], [1], [0, 0, 1, 1], [], []>} : vector<32x128xbf16>, vector<128x128xbf16>, vector<32x128xf32> -> vector<32x128xf32>
    %141 = arith.addf %138, %140 : vector<32x128xf32>
    %c0_84 = arith.constant 0 : index
    %c0_85 = arith.constant 0 : index
    %142 = vector.load %arg16[%c0_84, %c0_85] : memref<1x128xf32, #tpu.memory_space<vmem>>, vector<1x128xf32>
    %143 = vector.broadcast %142 : vector<1x128xf32> to vector<32x128xf32>
    %144 = arith.addf %141, %143 : vector<32x128xf32>
    %c0_86 = arith.constant 0 : index
    %c0_87 = arith.constant 0 : index
    %145 = vector.load %arg17[%c0_86, %c0_87] : memref<32x128xf32, #tpu.memory_space<vmem>>, vector<32x128xf32>
    tpu.vector_store %arg17[%c0_86, %c0_87], %144 {strides = array<i32>} : memref<32x128xf32, #tpu.memory_space<vmem>>, vector<32x128xf32>,
    return
  }
}

</mosaic_0001>

<llo_original>
// kernel: recombination_block.1
$region0: #{recombination_block.1}
  #allocation0 [shape = 'u32[]', space=smem, size = 0x4, offset = 0x4, fixed_abs, tag = 'smem constant byte address 0x4 - core index']
  #allocation1 [shape = 'u32[144,128]{1,0:T(1,128)}', space=vmem, size = 0x12000, scoped, tag = 'internal scratch']
  %s0 = inlined_call_operand.vmem [shape: f32[32,128], index: 0, kind: input, shape index: {}]
  %s1 = inlined_call_operand.vmem [shape: s32[32,256], index: 1, kind: input, shape index: {}]
  %s2 = inlined_call_operand.vmem [shape: bf16[128,256], index: 2, kind: input, shape index: {}]
  %s3 = inlined_call_operand.vmem [shape: f32[1,256], index: 3, kind: input, shape index: {}]
  %s4 = inlined_call_operand.vmem [shape: f32[1,256], index: 4, kind: input, shape index: {}]
  %s5 = inlined_call_operand.vmem [shape: f32[1,256], index: 5, kind: input, shape index: {}]
  %s6 = inlined_call_operand.vmem [shape: f32[256,16], index: 6, kind: input, shape index: {}]
  %s7 = inlined_call_operand.hbm [shape: f32[16,256], index: 7, kind: input, shape index: {}]
  %s8 = inlined_call_operand.vmem [shape: bf16[3,256,256], index: 8, kind: input, shape index: {}]
  %s9 = inlined_call_operand.vmem [shape: f32[1,256], index: 9, kind: input, shape index: {}]
  %s10 = inlined_call_operand.hbm [shape: bf16[3,256,128], index: 10, kind: input, shape index: {}]
  %s11 = inlined_call_operand.vmem [shape: f32[1,128], index: 11, kind: input, shape index: {}]
  %s12 = inlined_call_operand.hbm [shape: bf16[128,256], index: 12, kind: input, shape index: {}]
  %s13 = inlined_call_operand.vmem [shape: f32[1,256], index: 13, kind: input, shape index: {}]
  %s14 = inlined_call_operand.hbm [shape: bf16[256,128], index: 14, kind: input, shape index: {}]
  %s15 = inlined_call_operand.vmem [shape: bf16[128,128], index: 15, kind: input, shape index: {}]
  %s16 = inlined_call_operand.vmem [shape: f32[1,128], index: 16, kind: input, shape index: {}]
  %s17 = inlined_call_operand.vmem [shape: f32[32,128], index: 17, kind: output, shape index: {}]
  %s18 = sld [smem:[#allocation0]]
  $region94: #{recombination_block.1} parent=0
    _
  %s20 = ssub.s32 1, %s18
  %s21 = scalar_select 0, %s20, %s18
  $region1: #{recombination_block.1} parent=0
    #allocation2 [shape = 'u8[16384]{0}', space=vmem, size = 0x4000, scoped, tag = 'input window, operand 7, single buffered']
    #allocation3 [shape = 's32[1]{0}', space=sflag, size = 0x4, scoped, tag = 'scoped memory for recombination_block.1']
    #allocation4 [shape = 'u8[196608]{0}', space=vmem, size = 0x30000, scoped, tag = 'input window, operand 10, single buffered']
    #allocation5 [shape = 's32[1]{0}', space=sflag, size = 0x4, scoped, tag = 'scoped memory for recombination_block.1']
    #allocation6 [shape = 'u8[65536]{0}', space=vmem, size = 0x10000, scoped, tag = 'input window, operand 12, single buffered']
    #allocation7 [shape = 'u8[65536]{0}', space=vmem, size = 0x10000, scoped, tag = 'input window, operand 14, single buffered']
    #allocation8 [shape = 's32[1]{0}', space=sflag, size = 0x4, scoped, tag = 'scoped memory for recombination_block.1']
    %22 = vsyncpa [#allocation3], 0
    %23 = vsyncpa [#allocation5], 0
    %24 = vsyncpa [#allocation8], 0
    // Predicated region
    $region2: #{recombination_block.1} parent=1 // pred_check
      _
    $region3: #{recombination_block.1} parent=1 // pred_check_branch
      %26 = sbr.rel (0) target = $region5
    $region4: #{recombination_block.1} parent=1 // pred_region
      _
    $region5: #{recombination_block.1} parent=1 // pred_fallthru
      _
    // Predicated region
    $region6: #{recombination_block.1} parent=1 // pred_check
      _
    $region7: #{recombination_block.1} parent=1 // pred_check_branch
      %28 = sbr.rel (0) target = $region9
    $region8: #{recombination_block.1} parent=1 // pred_region
      _
    $region9: #{recombination_block.1} parent=1 // pred_fallthru
      _
    // Predicated region
    $region10: #{recombination_block.1} parent=1 // pred_check
      _
    $region11: #{recombination_block.1} parent=1 // pred_check_branch
      %30 = sbr.rel (0) target = $region13
    $region12: #{recombination_block.1} parent=1 // pred_region
      _
    $region13: #{recombination_block.1} parent=1 // pred_fallthru
      _
    // Predicated region
    $region14: #{recombination_block.1} parent=1 // pred_check
      _
    $region15: #{recombination_block.1} parent=1 // pred_check_branch
      %32 = sbr.rel (0) target = $region17
    $region16: #{recombination_block.1} parent=1 // pred_region
      _
    $region17: #{recombination_block.1} parent=1 // pred_fallthru
      _
    // Predicated region
    $region18: #{recombination_block.1} parent=1 // pred_check
      _
    $region19: #{recombination_block.1} parent=1 // pred_check_branch
      %34 = sbr.rel (0) target = $region21
    $region20: #{recombination_block.1} parent=1 // pred_region
      _
    $region21: #{recombination_block.1} parent=1 // pred_fallthru
      _
    // Predicated region
    $region22: #{recombination_block.1} parent=1 // pred_check
      _
    $region23: #{recombination_block.1} parent=1 // pred_check_branch
      %36 = sbr.rel (0) target = $region25
    $region24: #{recombination_block.1} parent=1 // pred_region
      _
    $region25: #{recombination_block.1} parent=1 // pred_fallthru
      _
    // Predicated region
    $region26: #{recombination_block.1} parent=1 // pred_check
      _
    $region27: #{recombination_block.1} parent=1 // pred_check_branch
      %38 = sbr.rel (0) target = $region29
    $region28: #{recombination_block.1} parent=1 // pred_region
      _
    $region29: #{recombination_block.1} parent=1 // pred_fallthru
      _
    // Predicated region
    $region30: #{recombination_block.1} parent=1 // pred_check
      _
    $region31: #{recombination_block.1} parent=1 // pred_check_branch
      %40 = sbr.rel (0) target = $region33
    $region32: #{recombination_block.1} parent=1 // pred_region
      %s42 = ssub.s32 512, 512
      %43 = vsyncadd [#allocation3], %s42
      %s44 = sshll.u32 [#allocation2], 4
      %s45 = int_to_ptr.vmem [resolvable:$true] %s44
      %50 = dma.hbm_to_vmem [thread:$0]  %s7, 512, %s45, [#allocation3], 256, 256, 16
    $region33: #{recombination_block.1} parent=1 // pred_fallthru
      _
    // Predicated region
    $region34: #{recombination_block.1} parent=1 // pred_check
      _
    $region35: #{recombination_block.1} parent=1 // pred_check_branch
      %52 = sbr.rel (0) target = $region37
    $region36: #{recombination_block.1} parent=1 // pred_region
      _
    $region37: #{recombination_block.1} parent=1 // pred_fallthru
      _
    // Predicated region
    $region38: #{recombination_block.1} parent=1 // pred_check
      _
    $region39: #{recombination_block.1} parent=1 // pred_check_branch
      %54 = sbr.rel (0) target = $region41
    $region40: #{recombination_block.1} parent=1 // pred_region
      _
    $region41: #{recombination_block.1} parent=1 // pred_fallthru
      _
    // Predicated region
    $region42: #{recombination_block.1} parent=1 // pred_check
      _
    $region43: #{recombination_block.1} parent=1 // pred_check_branch
      %56 = sbr.rel (0) target = $region45
    $region44: #{recombination_block.1} parent=1 // pred_region
      %s58 = ssub.s32 6144, 6144
      %59 = vsyncadd [#allocation5], %s58
      %s60 = sshll.u32 [#allocation4], 4
      %s61 = int_to_ptr.vmem [resolvable:$true] %s60
      %66 = dma.hbm_to_vmem [thread:$0]  %s10, 6144, %s61, [#allocation5], 64, 64, 4
    $region45: #{recombination_block.1} parent=1 // pred_fallthru
      _
    // Predicated region
    $region46: #{recombination_block.1} parent=1 // pred_check
      _
    $region47: #{recombination_block.1} parent=1 // pred_check_branch
      %68 = sbr.rel (0) target = $region49
    $region48: #{recombination_block.1} parent=1 // pred_region
      _
    $region49: #{recombination_block.1} parent=1 // pred_fallthru
      _
    // Predicated region
    $region50: #{recombination_block.1} parent=1 // pred_check
      _
    $region51: #{recombination_block.1} parent=1 // pred_check_branch
      %70 = sbr.rel (0) target = $region53
    $region52: #{recombination_block.1} parent=1 // pred_region
      %s72 = ssub.s32 2048, 2048
      %73 = vsyncadd [#allocation5], %s72
      %s74 = sshll.u32 [#allocation6], 4
      %s75 = int_to_ptr.vmem [resolvable:$true] %s74
      %80 = dma.hbm_to_vmem [thread:$0]  %s12, 2048, %s75, [#allocation5], 128, 128, 8
    $region53: #{recombination_block.1} parent=1 // pred_fallthru
      _
    // Predicated region
    $region54: #{recombination_block.1} parent=1 // pred_check
      _
    $region55: #{recombination_block.1} parent=1 // pred_check_branch
      %82 = sbr.rel (0) target = $region57
    $region56: #{recombination_block.1} parent=1 // pred_region
      _
    $region57: #{recombination_block.1} parent=1 // pred_fallthru
      _
    // Predicated region
    $region58: #{recombination_block.1} parent=1 // pred_check
      _
    $region59: #{recombination_block.1} parent=1 // pred_check_branch
      %84 = sbr.rel (0) target = $region61
    $region60: #{recombination_block.1} parent=1 // pred_region
      %s86 = ssub.s32 2048, 2048
      %87 = vsyncadd [#allocation8], %s86
      %s88 = sshll.u32 [#allocation7], 4
      %s89 = int_to_ptr.vmem [resolvable:$true] %s88
      %94 = dma.hbm_to_vmem [thread:$0]  %s14, 2048, %s89, [#allocation8], 64, 64, 4
    $region61: #{recombination_block.1} parent=1 // pred_fallthru
      _
    // Predicated region
    $region62: #{recombination_block.1} parent=1 // pred_check
      _
    $region63: #{recombination_block.1} parent=1 // pred_check_branch
      %96 = sbr.rel (0) target = $region65
    $region64: #{recombination_block.1} parent=1 // pred_region
      _
    $region65: #{recombination_block.1} parent=1 // pred_fallthru
      _
    // Predicated region
    $region66: #{recombination_block.1} parent=1 // pred_check
      _
    $region67: #{recombination_block.1} parent=1 // pred_check_branch
      %98 = sbr.rel (0) target = $region69
    $region68: #{recombination_block.1} parent=1 // pred_region
      _
    $region69: #{recombination_block.1} parent=1 // pred_fallthru
      _
    // Predicated region
    $region70: #{recombination_block.1} parent=1 // pred_check
      _
    $region71: #{recombination_block.1} parent=1 // pred_check_branch
      %100 = sbr.rel (0) target = $region73
    $region72: #{recombination_block.1} parent=1 // pred_region
      %101 = dma.done [#allocation3], 512
    $region73: #{recombination_block.1} parent=1 // pred_fallthru
      _
    // Predicated region
    $region74: #{recombination_block.1} parent=1 // pred_check
      _
    $region75: #{recombination_block.1} parent=1 // pred_check_branch
      %103 = sbr.rel (0) target = $region77
    $region76: #{recombination_block.1} parent=1 // pred_region
      %104 = dma.done [#allocation5], 6144
    $region77: #{recombination_block.1} parent=1 // pred_fallthru
      _
    // Predicated region
    $region78: #{recombination_block.1} parent=1 // pred_check
      _
    $region79: #{recombination_block.1} parent=1 // pred_check_branch
      %106 = sbr.rel (0) target = $region81
    $region80: #{recombination_block.1} parent=1 // pred_region
      %107 = dma.done [#allocation5], 2048
    $region81: #{recombination_block.1} parent=1 // pred_fallthru
      _
    // Predicated region
    $region82: #{recombination_block.1} parent=1 // pred_check
      _
    $region83: #{recombination_block.1} parent=1 // pred_check_branch
      %109 = sbr.rel (0) target = $region85
    $region84: #{recombination_block.1} parent=1 // pred_region
      %110 = dma.done [#allocation8], 2048
    $region85: #{recombination_block.1} parent=1 // pred_fallthru
      _
    %v112 = vld [vmem:[%s0] sm:$0xff]
    %v113 = vld [vmem:[%s0 + $0x8] sm:$0xff]
    %v114 = vld [vmem:[%s0 + $0x10] sm:$0xff]
    %v115 = vld [vmem:[%s0 + $0x18] sm:$0xff]
    %v116 = vpack.c.bf16 %v113, %v112
    %v117 = vpack.c.bf16 %v115, %v114
    %v118 = vld [vmem:[%s1] sm:$0xff]
    %v119 = vld [vmem:[%s1 + $0x8] sm:$0xff]
    %v120 = vld [vmem:[%s1 + $0x10] sm:$0xff]
    %v121 = vld [vmem:[%s1 + $0x18] sm:$0xff]
    %v122 = vld [vmem:[%s1 + $0x20] sm:$0xff]
    %v123 = vld [vmem:[%s1 + $0x28] sm:$0xff]
    %v124 = vld [vmem:[%s1 + $0x30] sm:$0xff]
    %v125 = vld [vmem:[%s1 + $0x38] sm:$0xff]
    %v126 = vld [vmem:[%s2] sm:$0xff]
    %v127 = vld [vmem:[%s2 + $0x8] sm:$0xff]
    %v128 = vld [vmem:[%s2 + $0x10] sm:$0xff]
    %v129 = vld [vmem:[%s2 + $0x18] sm:$0xff]
    %v130 = vld [vmem:[%s2 + $0x20] sm:$0xff]
    %v131 = vld [vmem:[%s2 + $0x28] sm:$0xff]
    %v132 = vld [vmem:[%s2 + $0x30] sm:$0xff]
    %v133 = vld [vmem:[%s2 + $0x38] sm:$0xff]
    %v134 = vld [vmem:[%s2 + $0x40] sm:$0xff]
    %v135 = vld [vmem:[%s2 + $0x48] sm:$0xff]
    %v136 = vld [vmem:[%s2 + $0x50] sm:$0xff]
    %v137 = vld [vmem:[%s2 + $0x58] sm:$0xff]
    %v138 = vld [vmem:[%s2 + $0x60] sm:$0xff]
    %v139 = vld [vmem:[%s2 + $0x68] sm:$0xff]
    %v140 = vld [vmem:[%s2 + $0x70] sm:$0xff]
    %v141 = vld [vmem:[%s2 + $0x78] sm:$0xff]
    %v142 = vld [vmem:[%s3] sm:$0x3]
    %v144 = vlaneseq
    %v145 = vshrl.u32 %v144, 7
    %v146 = vsub.s32 0, %v145
    %v147 = vrot.slane %v142, %v146
    %v148 = vlaneseq
    %v149 = vshrl.u32 %v148, 7
    %v150 = vsub.s32 1, %v149
    %v151 = vrot.slane %v142, %v150
    %v170 = vunpack.c.l.b16 %v126
    %v171 = vunpack.c.h.b16 %v126
    %v172 = vunpack.c.l.b16 %v127
    %v173 = vunpack.c.h.b16 %v127
    %v174 = vunpack.c.l.b16 %v128
    %v175 = vunpack.c.h.b16 %v128
    %v176 = vunpack.c.l.b16 %v129
    %v177 = vunpack.c.h.b16 %v129
    %v178 = vunpack.c.l.b16 %v130
    %v179 = vunpack.c.h.b16 %v130
    %v180 = vunpack.c.l.b16 %v131
    %v181 = vunpack.c.h.b16 %v131
    %v182 = vunpack.c.l.b16 %v132
    %v183 = vunpack.c.h.b16 %v132
    %v184 = vunpack.c.l.b16 %v133
    %v185 = vunpack.c.h.b16 %v133
    %v186 = vunpack.c.l.b16 %v134
    %v187 = vunpack.c.h.b16 %v134
    %v188 = vunpack.c.l.b16 %v135
    %v189 = vunpack.c.h.b16 %v135
    %v190 = vunpack.c.l.b16 %v136
    %v191 = vunpack.c.h.b16 %v136
    %v192 = vunpack.c.l.b16 %v137
    %v193 = vunpack.c.h.b16 %v137
    %v194 = vunpack.c.l.b16 %v138
    %v195 = vunpack.c.h.b16 %v138
    %v196 = vunpack.c.l.b16 %v139
    %v197 = vunpack.c.h.b16 %v139
    %v198 = vunpack.c.l.b16 %v140
    %v199 = vunpack.c.h.b16 %v140
    %v200 = vunpack.c.l.b16 %v141
    %v201 = vunpack.c.h.b16 %v141
    %v202 = vpack.c.b16 %v172, %v170
    %v203 = vpack.c.b16 %v173, %v171
    %v204 = vpack.c.b16 %v176, %v174
    %v205 = vpack.c.b16 %v177, %v175
    %v206 = vpack.c.b16 %v180, %v178
    %v207 = vpack.c.b16 %v181, %v179
    %v208 = vpack.c.b16 %v184, %v182
    %v209 = vpack.c.b16 %v185, %v183
    %v210 = vpack.c.b16 %v188, %v186
    %v211 = vpack.c.b16 %v189, %v187
    %v212 = vpack.c.b16 %v192, %v190
    %v213 = vpack.c.b16 %v193, %v191
    %v214 = vpack.c.b16 %v196, %v194
    %v215 = vpack.c.b16 %v197, %v195
    %v216 = vpack.c.b16 %v200, %v198
    %v217 = vpack.c.b16 %v201, %v199
    %234 = vmatprep.subr.bf16.mxu0 %v217
    %235 = vmatpush1.bf16.msra.mxu0 %v216
    %236 = vmatprep.subr.bf16.mxu0 %v215
    %237 = vmatpush1.bf16.msra.mxu0 %v214
    %238 = vmatprep.subr.bf16.mxu0 %v213
    %239 = vmatpush1.bf16.msra.mxu0 %v212
    %240 = vmatprep.subr.bf16.mxu0 %v211
    %241 = vmatpush1.bf16.msra.mxu0 %v210
    %242 = vmatprep.subr.bf16.mxu0 %v209
    %243 = vmatpush1.bf16.msra.mxu0 %v208
    %244 = vmatprep.subr.bf16.mxu0 %v207
    %245 = vmatpush1.bf16.msra.mxu0 %v206
    %246 = vmatprep.subr.bf16.mxu0 %v205
    %247 = vmatpush1.bf16.msra.mxu0 %v204
    %248 = vmatprep.subr.bf16.mxu0 %v203
    %249 = vmatpush1.bf16.msra.mxu0 %v202
    %250 = vmatprep.subr.bf16.mxu0 0
    %251 = vmatpush2.bf16.msra.mxu0 0
    %252 = vmatprep.subr.bf16.mxu0 0
    %253 = vmatpush2.bf16.msra.mxu0 0
    %254 = vmatprep.subr.bf16.mxu0 0
    %255 = vmatpush2.bf16.msra.mxu0 0
    %256 = vmatprep.subr.bf16.mxu0 0
    %257 = vmatpush2.bf16.msra.mxu0 0
    %258 = vmatprep.subr.bf16.mxu0 0
    %259 = vmatpush2.bf16.msra.mxu0 0
    %260 = vmatprep.subr.bf16.mxu0 0
    %261 = vmatpush2.bf16.msra.mxu0 0
    %262 = vmatprep.subr.bf16.mxu0 0
    %263 = vmatpush2.bf16.msra.mxu0 0
    %264 = vmatprep.subr.bf16.mxu0 0
    %265 = vmatpush2.bf16.msra.mxu0 0
    %266 = vmatprep.mubr.bf16.mxu0 0
    %267 = vmatmul.mubr.bf16.gmra.mxu0 %v116
    %v268 = vpop.f32.mrf.mxu0
    %v269 = vadd.f32 %v147, %v268
    %v270 = vpop.f32.mrf.mxu0
    %v271 = vadd.f32 %v151, %v270
    %v272 = vpop.f32.mrf.mxu0
    %v273 = vadd.f32 %v147, %v272
    %v274 = vpop.f32.mrf.mxu0
    %v275 = vadd.f32 %v151, %v274
    %276 = vmatprep.mubr.bf16.mxu0 0
    %277 = vmatmul.mubr.bf16.gmra.mxu0 %v117
    %v278 = vpop.f32.mrf.mxu0
    %v279 = vadd.f32 %v147, %v278
    %v280 = vpop.f32.mrf.mxu0
    %v281 = vadd.f32 %v151, %v280
    %v282 = vpop.f32.mrf.mxu0
    %v283 = vadd.f32 %v147, %v282
    %v284 = vpop.f32.mrf.mxu0
    %v285 = vadd.f32 %v151, %v284
    %286 = vdwg.mxu0
    %v287 = vadd.f32 %v269, %v273
    %v288 = vadd.f32 %v287, %v279
    %v289 = vadd.f32 %v288, %v283
    %v290 = vrot.slane %v289, 4
    %v291 = vadd.f32 %v289, %v290
    %v292 = vrot.slane %v291, 2
    %v293 = vadd.f32 %v291, %v292
    %v294 = vrot.slane %v293, 1
    %v295 = vadd.f32 %v293, %v294
    %v296 = vadd.f32 %v271, %v275
    %v297 = vadd.f32 %v296, %v281
    %v298 = vadd.f32 %v297, %v285
    %v299 = vrot.slane %v298, 4
    %v300 = vadd.f32 %v298, %v299
    %v301 = vrot.slane %v300, 2
    %v302 = vadd.f32 %v300, %v301
    %v303 = vrot.slane %v302, 1
    %v304 = vadd.f32 %v302, %v303
    %v305 = vld [vmem:[%s6] sm:$0xff]
    %v306 = vld [vmem:[%s6 + $0x8] sm:$0xff]
    %v307 = vld [vmem:[%s6 + $0x10] sm:$0xff]
    %v308 = vld [vmem:[%s6 + $0x18] sm:$0xff]
    %v309 = vld [vmem:[%s6 + $0x20] sm:$0xff]
    %v310 = vld [vmem:[%s6 + $0x28] sm:$0xff]
    %v311 = vld [vmem:[%s6 + $0x30] sm:$0xff]
    %v312 = vld [vmem:[%s6 + $0x38] sm:$0xff]
    %v313 = vld [vmem:[%s6 + $0x40] sm:$0xff]
    %v314 = vld [vmem:[%s6 + $0x48] sm:$0xff]
    %v315 = vld [vmem:[%s6 + $0x50] sm:$0xff]
    %v316 = vld [vmem:[%s6 + $0x58] sm:$0xff]
    %v317 = vld [vmem:[%s6 + $0x60] sm:$0xff]
    %v318 = vld [vmem:[%s6 + $0x68] sm:$0xff]
    %v319 = vld [vmem:[%s6 + $0x70] sm:$0xff]
    %v320 = vld [vmem:[%s6 + $0x78] sm:$0xff]
    %v321 = vld [vmem:[%s6 + $0x80] sm:$0xff]
    %v322 = vld [vmem:[%s6 + $0x88] sm:$0xff]
    %v323 = vld [vmem:[%s6 + $0x90] sm:$0xff]
    %v324 = vld [vmem:[%s6 + $0x98] sm:$0xff]
    %v325 = vld [vmem:[%s6 + $0xa0] sm:$0xff]
    %v326 = vld [vmem:[%s6 + $0xa8] sm:$0xff]
    %v327 = vld [vmem:[%s6 + $0xb0] sm:$0xff]
    %v328 = vld [vmem:[%s6 + $0xb8] sm:$0xff]
    %v329 = vld [vmem:[%s6 + $0xc0] sm:$0xff]
    %v330 = vld [vmem:[%s6 + $0xc8] sm:$0xff]
    %v331 = vld [vmem:[%s6 + $0xd0] sm:$0xff]
    %v332 = vld [vmem:[%s6 + $0xd8] sm:$0xff]
    %v333 = vld [vmem:[%s6 + $0xe0] sm:$0xff]
    %v334 = vld [vmem:[%s6 + $0xe8] sm:$0xff]
    %v335 = vld [vmem:[%s6 + $0xf0] sm:$0xff]
    %v336 = vld [vmem:[%s6 + $0xf8] sm:$0xff]
    %337 = vmatprep.subr.mxu0 0.0
    %338 = vmatpush1.msra.mxu0 %v320
    %339 = vmatprep.subr.mxu0 0.0
    %340 = vmatpush1.msra.mxu0 %v319
    %341 = vmatprep.subr.mxu0 0.0
    %342 = vmatpush1.msra.mxu0 %v318
    %343 = vmatprep.subr.mxu0 0.0
    %344 = vmatpush1.msra.mxu0 %v317
    %345 = vmatprep.subr.mxu0 0.0
    %346 = vmatpush1.msra.mxu0 %v316
    %347 = vmatprep.subr.mxu0 0.0
    %348 = vmatpush1.msra.mxu0 %v315
    %349 = vmatprep.subr.mxu0 0.0
    %350 = vmatpush1.msra.mxu0 %v314
    %351 = vmatprep.subr.mxu0 0.0
    %352 = vmatpush1.msra.mxu0 %v313
    %353 = vmatprep.subr.mxu0 0.0
    %354 = vmatpush1.msra.mxu0 %v312
    %355 = vmatprep.subr.mxu0 0.0
    %356 = vmatpush1.msra.mxu0 %v311
    %357 = vmatprep.subr.mxu0 0.0
    %358 = vmatpush1.msra.mxu0 %v310
    %359 = vmatprep.subr.mxu0 0.0
    %360 = vmatpush1.msra.mxu0 %v309
    %361 = vmatprep.subr.mxu0 0.0
    %362 = vmatpush1.msra.mxu0 %v308
    %363 = vmatprep.subr.mxu0 0.0
    %364 = vmatpush1.msra.mxu0 %v307
    %365 = vmatprep.subr.mxu0 0.0
    %366 = vmatpush1.msra.mxu0 %v306
    %367 = vmatprep.subr.mxu0 0.0
    %368 = vmatpush1.msra.mxu0 %v305
    %369 = vmatprep.subr.mxu0 0.0
    %370 = vmatpush2.msra.mxu0 %v336
    %371 = vmatprep.subr.mxu0 0.0
    %372 = vmatpush2.msra.mxu0 %v335
    %373 = vmatprep.subr.mxu0 0.0
    %374 = vmatpush2.msra.mxu0 %v334
    %375 = vmatprep.subr.mxu0 0.0
    %376 = vmatpush2.msra.mxu0 %v333
    %377 = vmatprep.subr.mxu0 0.0
    %378 = vmatpush2.msra.mxu0 %v332
    %379 = vmatprep.subr.mxu0 0.0
    %380 = vmatpush2.msra.mxu0 %v331
    %381 = vmatprep.subr.mxu0 0.0
    %382 = vmatpush2.msra.mxu0 %v330
    %383 = vmatprep.subr.mxu0 0.0
    %384 = vmatpush2.msra.mxu0 %v329
    %385 = vmatprep.subr.mxu0 0.0
    %386 = vmatpush2.msra.mxu0 %v328
    %387 = vmatprep.subr.mxu0 0.0
    %388 = vmatpush2.msra.mxu0 %v327
    %389 = vmatprep.subr.mxu0 0.0
    %390 = vmatpush2.msra.mxu0 %v326
    %391 = vmatprep.subr.mxu0 0.0
    %392 = vmatpush2.msra.mxu0 %v325
    %393 = vmatprep.subr.mxu0 0.0
    %394 = vmatpush2.msra.mxu0 %v324
    %395 = vmatprep.subr.mxu0 0.0
    %396 = vmatpush2.msra.mxu0 %v323
    %397 = vmatprep.subr.mxu0 0.0
    %398 = vmatpush2.msra.mxu0 %v322
    %399 = vmatprep.subr.mxu0 0.0
    %400 = vmatpush2.msra.mxu0 %v321
    %401 = vmatprep.mubr.f32.mxu0 %v304
    %402 = vmatmul.mubr.f32.gmra.mxu0 %v295
    %v403 = vpop.f32.mrf.mxu0
    %v404 = vadd.f32 0.0, %v403
    %v405 = vpop.f32.mrf.mxu0
    %406 = vdwg.mxu0
    %v407 = vld [vmem:[#allocation2] sm:$0xff]
    %v408 = vld [vmem:[#allocation2 + $0x8] sm:$0xff]
    %v409 = vld [vmem:[#allocation2 + $0x10] sm:$0xff]
    %v410 = vld [vmem:[#allocation2 + $0x18] sm:$0xff]
    %vm411 = vcmask 130048
    %v413 = vsel %vm411, %v404, 0
    %415 = vmatprep.subr.mxu0 0.0
    %416 = vmatpush1.msra.mxu0 0.0
    %417 = vmatprep.subr.mxu0 0.0
    %418 = vmatpush1.msra.mxu0 0.0
    %419 = vmatprep.subr.mxu0 0.0
    %420 = vmatpush1.msra.mxu0 0.0
    %421 = vmatprep.subr.mxu0 0.0
    %422 = vmatpush1.msra.mxu0 0.0
    %423 = vmatprep.subr.mxu0 0.0
    %424 = vmatpush1.msra.mxu0 0.0
    %425 = vmatprep.subr.mxu0 0.0
    %426 = vmatpush1.msra.mxu0 0.0
    %427 = vmatprep.subr.mxu0 0.0
    %428 = vmatpush1.msra.mxu0 0.0
    %429 = vmatprep.subr.mxu0 0.0
    %430 = vmatpush1.msra.mxu0 0.0
    %431 = vmatprep.subr.mxu0 0.0
    %432 = vmatpush1.msra.mxu0 0.0
    %433 = vmatprep.subr.mxu0 0.0
    %434 = vmatpush1.msra.mxu0 0.0
    %435 = vmatprep.subr.mxu0 0.0
    %436 = vmatpush1.msra.mxu0 0.0
    %437 = vmatprep.subr.mxu0 0.0
    %438 = vmatpush1.msra.mxu0 0.0
    %439 = vmatprep.subr.mxu0 0.0
    %440 = vmatpush1.msra.mxu0 0.0
    %441 = vmatprep.subr.mxu0 0.0
    %442 = vmatpush1.msra.mxu0 0.0
    %443 = vmatprep.subr.mxu0 %v410
    %444 = vmatpush1.msra.mxu0 %v409
    %445 = vmatprep.subr.mxu0 %v408
    %446 = vmatpush1.msra.mxu0 %v407
    %447 = vmatprep.subr.mxu0 0.0
    %448 = vmatpush2.msra.mxu0 0.0
    %449 = vmatprep.subr.mxu0 0.0
    %450 = vmatpush2.msra.mxu0 0.0
    %451 = vmatprep.subr.mxu0 0.0
    %452 = vmatpush2.msra.mxu0 0.0
    %453 = vmatprep.subr.mxu0 0.0
    %454 = vmatpush2.msra.mxu0 0.0
    %455 = vmatprep.subr.mxu0 0.0
    %456 = vmatpush2.msra.mxu0 0.0
    %457 = vmatprep.subr.mxu0 0.0
    %458 = vmatpush2.msra.mxu0 0.0
    %459 = vmatprep.subr.mxu0 0.0
    %460 = vmatpush2.msra.mxu0 0.0
    %461 = vmatprep.subr.mxu0 0.0
    %462 = vmatpush2.msra.mxu0 0.0
    %463 = vmatprep.subr.mxu0 0.0
    %464 = vmatpush2.msra.mxu0 0.0
    %465 = vmatprep.subr.mxu0 0.0
    %466 = vmatpush2.msra.mxu0 0.0
    %467 = vmatprep.subr.mxu0 0.0
    %468 = vmatpush2.msra.mxu0 0.0
    %469 = vmatprep.subr.mxu0 0.0
    %470 = vmatpush2.msra.mxu0 0.0
    %471 = vmatprep.subr.mxu0 0.0
    %472 = vmatpush2.msra.mxu0 0.0
    %473 = vmatprep.subr.mxu0 0.0
    %474 = vmatpush2.msra.mxu0 0.0
    %475 = vmatprep.subr.mxu0 0.0
    %476 = vmatpush2.msra.mxu0 0.0
    %477 = vmatprep.subr.mxu0 0.0
    %478 = vmatpush2.msra.mxu0 0.0
    %479 = vmatprep.mubr.f32.mxu0 0.0
    %480 = vmatmul.mubr.f32.gmra.mxu0 %v413
    %v481 = vpop.f32.mrf.mxu0
    %v482 = vadd.f32 0.0, %v481
    %v483 = vpop.f32.mrf.mxu0
    %v484 = vadd.f32 0.0, %v483
    %485 = vdwg.mxu0
    %v486 = vmul.f32 %v482, 0.001953125
    %v487 = vmul.f32 %v484, 0.001953125
    %v488 = vlaneseq
    %v489 = vshrl.u32 %v488, 7
    %v490 = vsub.s32 0, %v489
    %v491 = vrot.slane %v486, %v490
    %v492 = vlaneseq
    %v493 = vshrl.u32 %v492, 7
    %v494 = vsub.s32 0, %v493
    %v495 = vrot.slane %v487, %v494
    %v496 = vsub.f32 %v269, %v491
    %v497 = vsub.f32 %v271, %v495
    %v498 = vsub.f32 %v273, %v491
    %v499 = vsub.f32 %v275, %v495
    %v500 = vsub.f32 %v279, %v491
    %v501 = vsub.f32 %v281, %v495
    %v502 = vsub.f32 %v283, %v491
    %v503 = vsub.f32 %v285, %v495
    %v504 = vmul.f32 %v496, %v496
    %v505 = vmul.f32 %v497, %v497
    %v506 = vmul.f32 %v498, %v498
    %v507 = vmul.f32 %v499, %v499
    %v508 = vmul.f32 %v500, %v500
    %v509 = vmul.f32 %v501, %v501
    %v510 = vmul.f32 %v502, %v502
    %v511 = vmul.f32 %v503, %v503
    %v512 = vadd.f32 %v504, %v506
    %v513 = vadd.f32 %v512, %v508
    %v514 = vadd.f32 %v513, %v510
    %v515 = vrot.slane %v514, 4
    %v516 = vadd.f32 %v514, %v515
    %v517 = vrot.slane %v516, 2
    %v518 = vadd.f32 %v516, %v517
    %v519 = vrot.slane %v518, 1
    %v520 = vadd.f32 %v518, %v519
    %v521 = vadd.f32 %v505, %v507
    %v522 = vadd.f32 %v521, %v509
    %v523 = vadd.f32 %v522, %v511
    %v524 = vrot.slane %v523, 4
    %v525 = vadd.f32 %v523, %v524
    %v526 = vrot.slane %v525, 2
    %v527 = vadd.f32 %v525, %v526
    %v528 = vrot.slane %v527, 1
    %v529 = vadd.f32 %v527, %v528
    %530 = vmatprep.subr.mxu0 0.0
    %531 = vmatpush1.msra.mxu0 %v320
    %532 = vmatprep.subr.mxu0 0.0
    %533 = vmatpush1.msra.mxu0 %v319
    %534 = vmatprep.subr.mxu0 0.0
    %535 = vmatpush1.msra.mxu0 %v318
    %536 = vmatprep.subr.mxu0 0.0
    %537 = vmatpush1.msra.mxu0 %v317
    %538 = vmatprep.subr.mxu0 0.0
    %539 = vmatpush1.msra.mxu0 %v316
    %540 = vmatprep.subr.mxu0 0.0
    %541 = vmatpush1.msra.mxu0 %v315
    %542 = vmatprep.subr.mxu0 0.0
    %543 = vmatpush1.msra.mxu0 %v314
    %544 = vmatprep.subr.mxu0 0.0
    %545 = vmatpush1.msra.mxu0 %v313
    %546 = vmatprep.subr.mxu0 0.0
    %547 = vmatpush1.msra.mxu0 %v312
    %548 = vmatprep.subr.mxu0 0.0
    %549 = vmatpush1.msra.mxu0 %v311
    %550 = vmatprep.subr.mxu0 0.0
    %551 = vmatpush1.msra.mxu0 %v310
    %552 = vmatprep.subr.mxu0 0.0
    %553 = vmatpush1.msra.mxu0 %v309
    %554 = vmatprep.subr.mxu0 0.0
    %555 = vmatpush1.msra.mxu0 %v308
    %556 = vmatprep.subr.mxu0 0.0
    %557 = vmatpush1.msra.mxu0 %v307
    %558 = vmatprep.subr.mxu0 0.0
    %559 = vmatpush1.msra.mxu0 %v306
    %560 = vmatprep.subr.mxu0 0.0
    %561 = vmatpush1.msra.mxu0 %v305
    %562 = vmatprep.subr.mxu0 0.0
    %563 = vmatpush2.msra.mxu0 %v336
    %564 = vmatprep.subr.mxu0 0.0
    %565 = vmatpush2.msra.mxu0 %v335
    %566 = vmatprep.subr.mxu0 0.0
    %567 = vmatpush2.msra.mxu0 %v334
    %568 = vmatprep.subr.mxu0 0.0
    %569 = vmatpush2.msra.mxu0 %v333
    %570 = vmatprep.subr.mxu0 0.0
    %571 = vmatpush2.msra.mxu0 %v332
    %572 = vmatprep.subr.mxu0 0.0
    %573 = vmatpush2.msra.mxu0 %v331
    %574 = vmatprep.subr.mxu0 0.0
    %575 = vmatpush2.msra.mxu0 %v330
    %576 = vmatprep.subr.mxu0 0.0
    %577 = vmatpush2.msra.mxu0 %v329
    %578 = vmatprep.subr.mxu0 0.0
    %579 = vmatpush2.msra.mxu0 %v328
    %580 = vmatprep.subr.mxu0 0.0
    %581 = vmatpush2.msra.mxu0 %v327
    %582 = vmatprep.subr.mxu0 0.0
    %583 = vmatpush2.msra.mxu0 %v326
    %584 = vmatprep.subr.mxu0 0.0
    %585 = vmatpush2.msra.mxu0 %v325
    %586 = vmatprep.subr.mxu0 0.0
    %587 = vmatpush2.msra.mxu0 %v324
    %588 = vmatprep.subr.mxu0 0.0
    %589 = vmatpush2.msra.mxu0 %v323
    %590 = vmatprep.subr.mxu0 0.0
    %591 = vmatpush2.msra.mxu0 %v322
    %592 = vmatprep.subr.mxu0 0.0
    %593 = vmatpush2.msra.mxu0 %v321
    %594 = vmatprep.mubr.f32.mxu0 %v529
    %595 = vmatmul.mubr.f32.gmra.mxu0 %v520
    %v596 = vpop.f32.mrf.mxu0
    %v597 = vadd.f32 0.0, %v596
    %v598 = vpop.f32.mrf.mxu0
    %599 = vdwg.mxu0
    %v601 = vsel %vm411, %v597, 0
    %603 = vmatprep.subr.mxu0 0.0
    %604 = vmatpush1.msra.mxu0 0.0
    %605 = vmatprep.subr.mxu0 0.0
    %606 = vmatpush1.msra.mxu0 0.0
    %607 = vmatprep.subr.mxu0 0.0
    %608 = vmatpush1.msra.mxu0 0.0
    %609 = vmatprep.subr.mxu0 0.0
    %610 = vmatpush1.msra.mxu0 0.0
    %611 = vmatprep.subr.mxu0 0.0
    %612 = vmatpush1.msra.mxu0 0.0
    %613 = vmatprep.subr.mxu0 0.0
    %614 = vmatpush1.msra.mxu0 0.0
    %615 = vmatprep.subr.mxu0 0.0
    %616 = vmatpush1.msra.mxu0 0.0
    %617 = vmatprep.subr.mxu0 0.0
    %618 = vmatpush1.msra.mxu0 0.0
    %619 = vmatprep.subr.mxu0 0.0
    %620 = vmatpush1.msra.mxu0 0.0
    %621 = vmatprep.subr.mxu0 0.0
    %622 = vmatpush1.msra.mxu0 0.0
    %623 = vmatprep.subr.mxu0 0.0
    %624 = vmatpush1.msra.mxu0 0.0
    %625 = vmatprep.subr.mxu0 0.0
    %626 = vmatpush1.msra.mxu0 0.0
    %627 = vmatprep.subr.mxu0 0.0
    %628 = vmatpush1.msra.mxu0 0.0
    %629 = vmatprep.subr.mxu0 0.0
    %630 = vmatpush1.msra.mxu0 0.0
    %631 = vmatprep.subr.mxu0 %v410
    %632 = vmatpush1.msra.mxu0 %v409
    %633 = vmatprep.subr.mxu0 %v408
    %634 = vmatpush1.msra.mxu0 %v407
    %635 = vmatprep.subr.mxu0 0.0
    %636 = vmatpush2.msra.mxu0 0.0
    %637 = vmatprep.subr.mxu0 0.0
    %638 = vmatpush2.msra.mxu0 0.0
    %639 = vmatprep.subr.mxu0 0.0
    %640 = vmatpush2.msra.mxu0 0.0
    %641 = vmatprep.subr.mxu0 0.0
    %642 = vmatpush2.msra.mxu0 0.0
    %643 = vmatprep.subr.mxu0 0.0
    %644 = vmatpush2.msra.mxu0 0.0
    %645 = vmatprep.subr.mxu0 0.0
    %646 = vmatpush2.msra.mxu0 0.0
    %647 = vmatprep.subr.mxu0 0.0
    %648 = vmatpush2.msra.mxu0 0.0
    %649 = vmatprep.subr.mxu0 0.0
    %650 = vmatpush2.msra.mxu0 0.0
    %651 = vmatprep.subr.mxu0 0.0
    %652 = vmatpush2.msra.mxu0 0.0
    %653 = vmatprep.subr.mxu0 0.0
    %654 = vmatpush2.msra.mxu0 0.0
    %655 = vmatprep.subr.mxu0 0.0
    %656 = vmatpush2.msra.mxu0 0.0
    %657 = vmatprep.subr.mxu0 0.0
    %658 = vmatpush2.msra.mxu0 0.0
    %659 = vmatprep.subr.mxu0 0.0
    %660 = vmatpush2.msra.mxu0 0.0
    %661 = vmatprep.subr.mxu0 0.0
    %662 = vmatpush2.msra.mxu0 0.0
    %663 = vmatprep.subr.mxu0 0.0
    %664 = vmatpush2.msra.mxu0 0.0
    %665 = vmatprep.subr.mxu0 0.0
    %666 = vmatpush2.msra.mxu0 0.0
    %667 = vmatprep.mubr.f32.mxu0 0.0
    %668 = vmatmul.mubr.f32.gmra.mxu0 %v601
    %v669 = vpop.f32.mrf.mxu0
    %v670 = vadd.f32 0.0, %v669
    %v671 = vpop.f32.mrf.mxu0
    %v672 = vadd.f32 0.0, %v671
    %673 = vdwg.mxu0
    %v674 = vmul.f32 %v670, 0.001953125
    %v675 = vmul.f32 %v672, 0.001953125
    %v676 = vadd.f32 %v674, 1e-05
    %v677 = vadd.f32 %v675, 1e-05
    %v678 = vrsqrt.pop %v676
    %v679 = vrsqrt.pop %v677
    %v680 = vlaneseq
    %v681 = vshrl.u32 %v680, 7
    %v682 = vsub.s32 0, %v681
    %v683 = vrot.slane %v678, %v682
    %v684 = vlaneseq
    %v685 = vshrl.u32 %v684, 7
    %v686 = vsub.s32 0, %v685
    %v687 = vrot.slane %v679, %v686
    %v688 = vmul.f32 %v496, %v683
    %v689 = vmul.f32 %v497, %v687
    %v690 = vmul.f32 %v498, %v683
    %v691 = vmul.f32 %v499, %v687
    %v692 = vmul.f32 %v500, %v683
    %v693 = vmul.f32 %v501, %v687
    %v694 = vmul.f32 %v502, %v683
    %v695 = vmul.f32 %v503, %v687
    %v696 = vld [vmem:[%s4] sm:$0x3]
    %v698 = vlaneseq
    %v699 = vshrl.u32 %v698, 7
    %v700 = vsub.s32 0, %v699
    %v701 = vrot.slane %v696, %v700
    %v702 = vlaneseq
    %v703 = vshrl.u32 %v702, 7
    %v704 = vsub.s32 1, %v703
    %v705 = vrot.slane %v696, %v704
    %v708 = vmul.f32 %v688, %v701
    %v709 = vmul.f32 %v689, %v705
    %v710 = vmul.f32 %v690, %v701
    %v711 = vmul.f32 %v691, %v705
    %v712 = vmul.f32 %v692, %v701
    %v713 = vmul.f32 %v693, %v705
    %v714 = vmul.f32 %v694, %v701
    %v715 = vmul.f32 %v695, %v705
    %v716 = vld [vmem:[%s5] sm:$0x3]
    %v718 = vlaneseq
    %v719 = vshrl.u32 %v718, 7
    %v720 = vsub.s32 0, %v719
    %v721 = vrot.slane %v716, %v720
    %v722 = vlaneseq
    %v723 = vshrl.u32 %v722, 7
    %v724 = vsub.s32 1, %v723
    %v725 = vrot.slane %v716, %v724
    %v728 = vadd.f32 %v708, %v721
    %v729 = vadd.f32 %v709, %v725
    %v730 = vadd.f32 %v710, %v721
    %v731 = vadd.f32 %v711, %v725
    %v732 = vadd.f32 %v712, %v721
    %v733 = vadd.f32 %v713, %v725
    %v734 = vadd.f32 %v714, %v721
    %v735 = vadd.f32 %v715, %v725
    %v736 = vmax.f32 %v728, 0.0
    %v737 = vmax.f32 %v729, 0.0
    %v738 = vmax.f32 %v730, 0.0
    %v739 = vmax.f32 %v731, 0.0
    %v740 = vmax.f32 %v732, 0.0
    %v741 = vmax.f32 %v733, 0.0
    %v742 = vmax.f32 %v734, 0.0
    %v743 = vmax.f32 %v735, 0.0
    %v744 = vmin.f32 %v736, 6.0
    %v745 = vmin.f32 %v737, 6.0
    %v746 = vmin.f32 %v738, 6.0
    %v747 = vmin.f32 %v739, 6.0
    %v748 = vmin.f32 %v740, 6.0
    %v749 = vmin.f32 %v741, 6.0
    %v750 = vmin.f32 %v742, 6.0
    %v751 = vmin.f32 %v743, 6.0
    %v752 = vrot.slane %v744, 7
    %v753 = vrot.slane %v745, 7
    %v754 = vrot.slane %v746, 7
    %v755 = vrot.slane %v747, 7
    %v756 = vrot.slane %v748, 7
    %v757 = vrot.slane %v749, 7
    %v758 = vrot.slane %v750, 7
    %v759 = vrot.slane %v751, 7
    %v760 = vlaneseq
    %v761 = vshrl.u32 %v760, 7
    %vm762 = vcmp.lt.s32.totalorder %v761, 1
    %v763 = vsel %vm762, %v756, %v758
    %v764 = vsel %vm762, %v757, %v759
    %v765 = vsel %vm762, %v754, %v756
    %v766 = vsel %vm762, %v755, %v757
    %v767 = vsel %vm762, %v752, %v754
    %v768 = vsel %vm762, %v753, %v755
    %v769 = vsel %vm762, %v758, %v752
    %v770 = vsel %vm762, %v759, %v753
    %v771 = vadd.s32 %v118, 4294967295
    %v772 = vadd.s32 %v119, 4294967295
    %v773 = vadd.s32 %v120, 4294967295
    %v774 = vadd.s32 %v121, 4294967295
    %v775 = vadd.s32 %v122, 4294967295
    %v776 = vadd.s32 %v123, 4294967295
    %v777 = vadd.s32 %v124, 4294967295
    %v778 = vadd.s32 %v125, 4294967295
    %vm779 = vcmp.ge.s32.totalorder %v771, 0
    %vm780 = vcmp.ge.s32.totalorder %v772, 0
    %vm781 = vcmp.ge.s32.totalorder %v773, 0
    %vm782 = vcmp.ge.s32.totalorder %v774, 0
    %vm783 = vcmp.ge.s32.totalorder %v775, 0
    %vm784 = vcmp.ge.s32.totalorder %v776, 0
    %vm785 = vcmp.ge.s32.totalorder %v777, 0
    %vm786 = vcmp.ge.s32.totalorder %v778, 0
    %vm787 = vcmp.lt.s32.totalorder %v771, 16
    %vm788 = vcmp.lt.s32.totalorder %v772, 16
    %vm789 = vcmp.lt.s32.totalorder %v773, 16
    %vm790 = vcmp.lt.s32.totalorder %v774, 16
    %vm791 = vcmp.lt.s32.totalorder %v775, 16
    %vm792 = vcmp.lt.s32.totalorder %v776, 16
    %vm793 = vcmp.lt.s32.totalorder %v777, 16
    %vm794 = vcmp.lt.s32.totalorder %v778, 16
    %vm795 = vmand %vm779, %vm787
    %vm796 = vmand %vm780, %vm788
    %vm797 = vmand %vm781, %vm789
    %vm798 = vmand %vm782, %vm790
    %vm799 = vmand %vm783, %vm791
    %vm800 = vmand %vm784, %vm792
    %vm801 = vmand %vm785, %vm793
    %vm802 = vmand %vm786, %vm794
    %v803 = vsel %vm795, %v769, 0.0
    %v804 = vsel %vm796, %v770, 0.0
    %v805 = vsel %vm797, %v767, 0.0
    %v806 = vsel %vm798, %v768, 0.0
    %v807 = vsel %vm799, %v765, 0.0
    %v808 = vsel %vm800, %v766, 0.0
    %v809 = vsel %vm801, %v763, 0.0
    %v810 = vsel %vm802, %v764, 0.0
    %v811 = vpack.c.bf16 %v805, %v803
    %v812 = vpack.c.bf16 %v806, %v804
    %v813 = vpack.c.bf16 %v809, %v807
    %v814 = vpack.c.bf16 %v810, %v808
    %v815 = vld [vmem:[%s8] sm:$0xff]
    %v816 = vld [vmem:[%s8 + $0x8] sm:$0xff]
    %v817 = vld [vmem:[%s8 + $0x10] sm:$0xff]
    %v818 = vld [vmem:[%s8 + $0x18] sm:$0xff]
    %v819 = vld [vmem:[%s8 + $0x20] sm:$0xff]
    %v820 = vld [vmem:[%s8 + $0x28] sm:$0xff]
    %v821 = vld [vmem:[%s8 + $0x30] sm:$0xff]
    %v822 = vld [vmem:[%s8 + $0x38] sm:$0xff]
    %v823 = vld [vmem:[%s8 + $0x40] sm:$0xff]
    %v824 = vld [vmem:[%s8 + $0x48] sm:$0xff]
    %v825 = vld [vmem:[%s8 + $0x50] sm:$0xff]
    %v826 = vld [vmem:[%s8 + $0x58] sm:$0xff]
    %v827 = vld [vmem:[%s8 + $0x60] sm:$0xff]
    %v828 = vld [vmem:[%s8 + $0x68] sm:$0xff]
    %v829 = vld [vmem:[%s8 + $0x70] sm:$0xff]
    %v830 = vld [vmem:[%s8 + $0x78] sm:$0xff]
    %v831 = vld [vmem:[%s8 + $0x80] sm:$0xff]
    %v832 = vld [vmem:[%s8 + $0x88] sm:$0xff]
    %v833 = vld [vmem:[%s8 + $0x90] sm:$0xff]
    %v834 = vld [vmem:[%s8 + $0x98] sm:$0xff]
    %v835 = vld [vmem:[%s8 + $0xa0] sm:$0xff]
    %v836 = vld [vmem:[%s8 + $0xa8] sm:$0xff]
    %v837 = vld [vmem:[%s8 + $0xb0] sm:$0xff]
    %v838 = vld [vmem:[%s8 + $0xb8] sm:$0xff]
    %v839 = vld [vmem:[%s8 + $0xc0] sm:$0xff]
    %v840 = vld [vmem:[%s8 + $0xc8] sm:$0xff]
    %v841 = vld [vmem:[%s8 + $0xd0] sm:$0xff]
    %v842 = vld [vmem:[%s8 + $0xd8] sm:$0xff]
    %v843 = vld [vmem:[%s8 + $0xe0] sm:$0xff]
    %v844 = vld [vmem:[%s8 + $0xe8] sm:$0xff]
    %v845 = vld [vmem:[%s8 + $0xf0] sm:$0xff]
    %v846 = vld [vmem:[%s8 + $0xf8] sm:$0xff]
    %v847 = vpack.c.bf16 %v746, %v744
    %v848 = vpack.c.bf16 %v747, %v745
    %v849 = vpack.c.bf16 %v750, %v748
    %v850 = vpack.c.bf16 %v751, %v749
    %s851 = scalar_lea.vmem %s8, 256
    %v852 = vld [vmem:[%s851] sm:$0xff]
    %v853 = vld [vmem:[%s851 + $0x8] sm:$0xff]
    %v854 = vld [vmem:[%s851 + $0x10] sm:$0xff]
    %v855 = vld [vmem:[%s851 + $0x18] sm:$0xff]
    %v856 = vld [vmem:[%s851 + $0x20] sm:$0xff]
    %v857 = vld [vmem:[%s851 + $0x28] sm:$0xff]
    %v858 = vld [vmem:[%s851 + $0x30] sm:$0xff]
    %v859 = vld [vmem:[%s851 + $0x38] sm:$0xff]
    %v860 = vld [vmem:[%s851 + $0x40] sm:$0xff]
    %v861 = vld [vmem:[%s851 + $0x48] sm:$0xff]
    %v862 = vld [vmem:[%s851 + $0x50] sm:$0xff]
    %v863 = vld [vmem:[%s851 + $0x58] sm:$0xff]
    %v864 = vld [vmem:[%s851 + $0x60] sm:$0xff]
    %v865 = vld [vmem:[%s851 + $0x68] sm:$0xff]
    %v866 = vld [vmem:[%s851 + $0x70] sm:$0xff]
    %v867 = vld [vmem:[%s851 + $0x78] sm:$0xff]
    %v868 = vld [vmem:[%s851 + $0x80] sm:$0xff]
    %v869 = vld [vmem:[%s851 + $0x88] sm:$0xff]
    %v870 = vld [vmem:[%s851 + $0x90] sm:$0xff]
    %v871 = vld [vmem:[%s851 + $0x98] sm:$0xff]
    %v872 = vld [vmem:[%s851 + $0xa0] sm:$0xff]
    %v873 = vld [vmem:[%s851 + $0xa8] sm:$0xff]
    %v874 = vld [vmem:[%s851 + $0xb0] sm:$0xff]
    %v875 = vld [vmem:[%s851 + $0xb8] sm:$0xff]
    %v876 = vld [vmem:[%s851 + $0xc0] sm:$0xff]
    %v877 = vld [vmem:[%s851 + $0xc8] sm:$0xff]
    %v878 = vld [vmem:[%s851 + $0xd0] sm:$0xff]
    %v879 = vld [vmem:[%s851 + $0xd8] sm:$0xff]
    %v880 = vld [vmem:[%s851 + $0xe0] sm:$0xff]
    %v881 = vld [vmem:[%s851 + $0xe8] sm:$0xff]
    %v882 = vld [vmem:[%s851 + $0xf0] sm:$0xff]
    %v883 = vld [vmem:[%s851 + $0xf8] sm:$0xff]
    %v916 = vunpack.c.l.b16 %v852
    %v917 = vunpack.c.h.b16 %v852
    %v918 = vunpack.c.l.b16 %v853
    %v919 = vunpack.c.h.b16 %v853
    %v920 = vunpack.c.l.b16 %v854
    %v921 = vunpack.c.h.b16 %v854
    %v922 = vunpack.c.l.b16 %v855
    %v923 = vunpack.c.h.b16 %v855
    %v924 = vunpack.c.l.b16 %v856
    %v925 = vunpack.c.h.b16 %v856
    %v926 = vunpack.c.l.b16 %v857
    %v927 = vunpack.c.h.b16 %v857
    %v928 = vunpack.c.l.b16 %v858
    %v929 = vunpack.c.h.b16 %v858
    %v930 = vunpack.c.l.b16 %v859
    %v931 = vunpack.c.h.b16 %v859
    %v932 = vunpack.c.l.b16 %v860
    %v933 = vunpack.c.h.b16 %v860
    %v934 = vunpack.c.l.b16 %v861
    %v935 = vunpack.c.h.b16 %v861
    %v936 = vunpack.c.l.b16 %v862
    %v937 = vunpack.c.h.b16 %v862
    %v938 = vunpack.c.l.b16 %v863
    %v939 = vunpack.c.h.b16 %v863
    %v940 = vunpack.c.l.b16 %v864
    %v941 = vunpack.c.h.b16 %v864
    %v942 = vunpack.c.l.b16 %v865
    %v943 = vunpack.c.h.b16 %v865
    %v944 = vunpack.c.l.b16 %v866
    %v945 = vunpack.c.h.b16 %v866
    %v946 = vunpack.c.l.b16 %v867
    %v947 = vunpack.c.h.b16 %v867
    %v948 = vunpack.c.l.b16 %v868
    %v949 = vunpack.c.h.b16 %v868
    %v950 = vunpack.c.l.b16 %v869
    %v951 = vunpack.c.h.b16 %v869
    %v952 = vunpack.c.l.b16 %v870
    %v953 = vunpack.c.h.b16 %v870
    %v954 = vunpack.c.l.b16 %v871
    %v955 = vunpack.c.h.b16 %v871
    %v956 = vunpack.c.l.b16 %v872
    %v957 = vunpack.c.h.b16 %v872
    %v958 = vunpack.c.l.b16 %v873
    %v959 = vunpack.c.h.b16 %v873
    %v960 = vunpack.c.l.b16 %v874
    %v961 = vunpack.c.h.b16 %v874
    %v962 = vunpack.c.l.b16 %v875
    %v963 = vunpack.c.h.b16 %v875
    %v964 = vunpack.c.l.b16 %v876
    %v965 = vunpack.c.h.b16 %v876
    %v966 = vunpack.c.l.b16 %v877
    %v967 = vunpack.c.h.b16 %v877
    %v968 = vunpack.c.l.b16 %v878
    %v969 = vunpack.c.h.b16 %v878
    %v970 = vunpack.c.l.b16 %v879
    %v971 = vunpack.c.h.b16 %v879
    %v972 = vunpack.c.l.b16 %v880
    %v973 = vunpack.c.h.b16 %v880
    %v974 = vunpack.c.l.b16 %v881
    %v975 = vunpack.c.h.b16 %v881
    %v976 = vunpack.c.l.b16 %v882
    %v977 = vunpack.c.h.b16 %v882
    %v978 = vunpack.c.l.b16 %v883
    %v979 = vunpack.c.h.b16 %v883
    %v980 = vpack.c.b16 %v918, %v916
    %v981 = vpack.c.b16 %v919, %v917
    %v982 = vpack.c.b16 %v922, %v920
    %v983 = vpack.c.b16 %v923, %v921
    %v984 = vpack.c.b16 %v926, %v924
    %v985 = vpack.c.b16 %v927, %v925
    %v986 = vpack.c.b16 %v930, %v928
    %v987 = vpack.c.b16 %v931, %v929
    %v988 = vpack.c.b16 %v934, %v932
    %v989 = vpack.c.b16 %v935, %v933
    %v990 = vpack.c.b16 %v938, %v936
    %v991 = vpack.c.b16 %v939, %v937
    %v992 = vpack.c.b16 %v942, %v940
    %v993 = vpack.c.b16 %v943, %v941
    %v994 = vpack.c.b16 %v946, %v944
    %v995 = vpack.c.b16 %v947, %v945
    %v996 = vpack.c.b16 %v950, %v948
    %v997 = vpack.c.b16 %v951, %v949
    %v998 = vpack.c.b16 %v954, %v952
    %v999 = vpack.c.b16 %v955, %v953
    %v1000 = vpack.c.b16 %v958, %v956
    %v1001 = vpack.c.b16 %v959, %v957
    %v1002 = vpack.c.b16 %v962, %v960
    %v1003 = vpack.c.b16 %v963, %v961
    %v1004 = vpack.c.b16 %v966, %v964
    %v1005 = vpack.c.b16 %v967, %v965
    %v1006 = vpack.c.b16 %v970, %v968
    %v1007 = vpack.c.b16 %v971, %v969
    %v1008 = vpack.c.b16 %v974, %v972
    %v1009 = vpack.c.b16 %v975, %v973
    %v1010 = vpack.c.b16 %v978, %v976
    %v1011 = vpack.c.b16 %v979, %v977
    %1044 = vmatprep.subr.bf16.mxu0 %v995
    %1045 = vmatpush1.bf16.msra.mxu0 %v994
    %1046 = vmatprep.subr.bf16.mxu0 %v993
    %1047 = vmatpush1.bf16.msra.mxu0 %v992
    %1048 = vmatprep.subr.bf16.mxu0 %v991
    %1049 = vmatpush1.bf16.msra.mxu0 %v990
    %1050 = vmatprep.subr.bf16.mxu0 %v989
    %1051 = vmatpush1.bf16.msra.mxu0 %v988
    %1052 = vmatprep.subr.bf16.mxu0 %v987
    %1053 = vmatpush1.bf16.msra.mxu0 %v986
    %1054 = vmatprep.subr.bf16.mxu0 %v985
    %1055 = vmatpush1.bf16.msra.mxu0 %v984
    %1056 = vmatprep.subr.bf16.mxu0 %v983
    %1057 = vmatpush1.bf16.msra.mxu0 %v982
    %1058 = vmatprep.subr.bf16.mxu0 %v981
    %1059 = vmatpush1.bf16.msra.mxu0 %v980
    %1060 = vmatprep.subr.bf16.mxu0 %v1011
    %1061 = vmatpush2.bf16.msra.mxu0 %v1010
    %1062 = vmatprep.subr.bf16.mxu0 %v1009
    %1063 = vmatpush2.bf16.msra.mxu0 %v1008
    %1064 = vmatprep.subr.bf16.mxu0 %v1007
    %1065 = vmatpush2.bf16.msra.mxu0 %v1006
    %1066 = vmatprep.subr.bf16.mxu0 %v1005
    %1067 = vmatpush2.bf16.msra.mxu0 %v1004
    %1068 = vmatprep.subr.bf16.mxu0 %v1003
    %1069 = vmatpush2.bf16.msra.mxu0 %v1002
    %1070 = vmatprep.subr.bf16.mxu0 %v1001
    %1071 = vmatpush2.bf16.msra.mxu0 %v1000
    %1072 = vmatprep.subr.bf16.mxu0 %v999
    %1073 = vmatpush2.bf16.msra.mxu0 %v998
    %1074 = vmatprep.subr.bf16.mxu0 %v997
    %1075 = vmatpush2.bf16.msra.mxu0 %v996
    %1076 = vmatprep.mubr.bf16.mxu0 %v848
    %1077 = vmatmul.mubr.bf16.gmra.mxu0 %v847
    %v1078 = vpop.f32.mrf.mxu0
    %v1079 = vadd.f32 0.0, %v1078
    %v1080 = vpop.f32.mrf.mxu0
    %v1081 = vadd.f32 0.0, %v1080
    %v1082 = vpop.f32.mrf.mxu0
    %v1083 = vadd.f32 0.0, %v1082
    %v1084 = vpop.f32.mrf.mxu0
    %v1085 = vadd.f32 0.0, %v1084
    %1086 = vmatprep.mubr.bf16.mxu0 %v850
    %1087 = vmatmul.mubr.bf16.gmra.mxu0 %v849
    %v1088 = vpop.f32.mrf.mxu0
    %v1089 = vadd.f32 0.0, %v1088
    %v1090 = vpop.f32.mrf.mxu0
    %v1091 = vadd.f32 0.0, %v1090
    %v1092 = vpop.f32.mrf.mxu0
    %v1093 = vadd.f32 0.0, %v1092
    %v1094 = vpop.f32.mrf.mxu0
    %v1095 = vadd.f32 0.0, %v1094
    %1096 = vdwg.mxu0
    %v1129 = vunpack.c.l.b16 %v815
    %v1130 = vunpack.c.h.b16 %v815
    %v1131 = vunpack.c.l.b16 %v816
    %v1132 = vunpack.c.h.b16 %v816
    %v1133 = vunpack.c.l.b16 %v817
    %v1134 = vunpack.c.h.b16 %v817
    %v1135 = vunpack.c.l.b16 %v818
    %v1136 = vunpack.c.h.b16 %v818
    %v1137 = vunpack.c.l.b16 %v819
    %v1138 = vunpack.c.h.b16 %v819
    %v1139 = vunpack.c.l.b16 %v820
    %v1140 = vunpack.c.h.b16 %v820
    %v1141 = vunpack.c.l.b16 %v821
    %v1142 = vunpack.c.h.b16 %v821
    %v1143 = vunpack.c.l.b16 %v822
    %v1144 = vunpack.c.h.b16 %v822
    %v1145 = vunpack.c.l.b16 %v823
    %v1146 = vunpack.c.h.b16 %v823
    %v1147 = vunpack.c.l.b16 %v824
    %v1148 = vunpack.c.h.b16 %v824
    %v1149 = vunpack.c.l.b16 %v825
    %v1150 = vunpack.c.h.b16 %v825
    %v1151 = vunpack.c.l.b16 %v826
    %v1152 = vunpack.c.h.b16 %v826
    %v1153 = vunpack.c.l.b16 %v827
    %v1154 = vunpack.c.h.b16 %v827
    %v1155 = vunpack.c.l.b16 %v828
    %v1156 = vunpack.c.h.b16 %v828
    %v1157 = vunpack.c.l.b16 %v829
    %v1158 = vunpack.c.h.b16 %v829
    %v1159 = vunpack.c.l.b16 %v830
    %v1160 = vunpack.c.h.b16 %v830
    %v1161 = vunpack.c.l.b16 %v831
    %v1162 = vunpack.c.h.b16 %v831
    %v1163 = vunpack.c.l.b16 %v832
    %v1164 = vunpack.c.h.b16 %v832
    %v1165 = vunpack.c.l.b16 %v833
    %v1166 = vunpack.c.h.b16 %v833
    %v1167 = vunpack.c.l.b16 %v834
    %v1168 = vunpack.c.h.b16 %v834
    %v1169 = vunpack.c.l.b16 %v835
    %v1170 = vunpack.c.h.b16 %v835
    %v1171 = vunpack.c.l.b16 %v836
    %v1172 = vunpack.c.h.b16 %v836
    %v1173 = vunpack.c.l.b16 %v837
    %v1174 = vunpack.c.h.b16 %v837
    %v1175 = vunpack.c.l.b16 %v838
    %v1176 = vunpack.c.h.b16 %v838
    %v1177 = vunpack.c.l.b16 %v839
    %v1178 = vunpack.c.h.b16 %v839
    %v1179 = vunpack.c.l.b16 %v840
    %v1180 = vunpack.c.h.b16 %v840
    %v1181 = vunpack.c.l.b16 %v841
    %v1182 = vunpack.c.h.b16 %v841
    %v1183 = vunpack.c.l.b16 %v842
    %v1184 = vunpack.c.h.b16 %v842
    %v1185 = vunpack.c.l.b16 %v843
    %v1186 = vunpack.c.h.b16 %v843
    %v1187 = vunpack.c.l.b16 %v844
    %v1188 = vunpack.c.h.b16 %v844
    %v1189 = vunpack.c.l.b16 %v845
    %v1190 = vunpack.c.h.b16 %v845
    %v1191 = vunpack.c.l.b16 %v846
    %v1192 = vunpack.c.h.b16 %v846
    %v1193 = vpack.c.b16 %v1131, %v1129
    %v1194 = vpack.c.b16 %v1132, %v1130
    %v1195 = vpack.c.b16 %v1135, %v1133
    %v1196 = vpack.c.b16 %v1136, %v1134
    %v1197 = vpack.c.b16 %v1139, %v1137
    %v1198 = vpack.c.b16 %v1140, %v1138
    %v1199 = vpack.c.b16 %v1143, %v1141
    %v1200 = vpack.c.b16 %v1144, %v1142
    %v1201 = vpack.c.b16 %v1147, %v1145
    %v1202 = vpack.c.b16 %v1148, %v1146
    %v1203 = vpack.c.b16 %v1151, %v1149
    %v1204 = vpack.c.b16 %v1152, %v1150
    %v1205 = vpack.c.b16 %v1155, %v1153
    %v1206 = vpack.c.b16 %v1156, %v1154
    %v1207 = vpack.c.b16 %v1159, %v1157
    %v1208 = vpack.c.b16 %v1160, %v1158
    %v1209 = vpack.c.b16 %v1163, %v1161
    %v1210 = vpack.c.b16 %v1164, %v1162
    %v1211 = vpack.c.b16 %v1167, %v1165
    %v1212 = vpack.c.b16 %v1168, %v1166
    %v1213 = vpack.c.b16 %v1171, %v1169
    %v1214 = vpack.c.b16 %v1172, %v1170
    %v1215 = vpack.c.b16 %v1175, %v1173
    %v1216 = vpack.c.b16 %v1176, %v1174
    %v1217 = vpack.c.b16 %v1179, %v1177
    %v1218 = vpack.c.b16 %v1180, %v1178
    %v1219 = vpack.c.b16 %v1183, %v1181
    %v1220 = vpack.c.b16 %v1184, %v1182
    %v1221 = vpack.c.b16 %v1187, %v1185
    %v1222 = vpack.c.b16 %v1188, %v1186
    %v1223 = vpack.c.b16 %v1191, %v1189
    %v1224 = vpack.c.b16 %v1192, %v1190
    %1257 = vmatprep.subr.bf16.mxu0 %v1208
    %1258 = vmatpush1.bf16.msra.mxu0 %v1207
    %1259 = vmatprep.subr.bf16.mxu0 %v1206
    %1260 = vmatpush1.bf16.msra.mxu0 %v1205
    %1261 = vmatprep.subr.bf16.mxu0 %v1204
    %1262 = vmatpush1.bf16.msra.mxu0 %v1203
    %1263 = vmatprep.subr.bf16.mxu0 %v1202
    %1264 = vmatpush1.bf16.msra.mxu0 %v1201
    %1265 = vmatprep.subr.bf16.mxu0 %v1200
    %1266 = vmatpush1.bf16.msra.mxu0 %v1199
    %1267 = vmatprep.subr.bf16.mxu0 %v1198
    %1268 = vmatpush1.bf16.msra.mxu0 %v1197
    %1269 = vmatprep.subr.bf16.mxu0 %v1196
    %1270 = vmatpush1.bf16.msra.mxu0 %v1195
    %1271 = vmatprep.subr.bf16.mxu0 %v1194
    %1272 = vmatpush1.bf16.msra.mxu0 %v1193
    %1273 = vmatprep.subr.bf16.mxu0 %v1224
    %1274 = vmatpush2.bf16.msra.mxu0 %v1223
    %1275 = vmatprep.subr.bf16.mxu0 %v1222
    %1276 = vmatpush2.bf16.msra.mxu0 %v1221
    %1277 = vmatprep.subr.bf16.mxu0 %v1220
    %1278 = vmatpush2.bf16.msra.mxu0 %v1219
    %1279 = vmatprep.subr.bf16.mxu0 %v1218
    %1280 = vmatpush2.bf16.msra.mxu0 %v1217
    %1281 = vmatprep.subr.bf16.mxu0 %v1216
    %1282 = vmatpush2.bf16.msra.mxu0 %v1215
    %1283 = vmatprep.subr.bf16.mxu0 %v1214
    %1284 = vmatpush2.bf16.msra.mxu0 %v1213
    %1285 = vmatprep.subr.bf16.mxu0 %v1212
    %1286 = vmatpush2.bf16.msra.mxu0 %v1211
    %1287 = vmatprep.subr.bf16.mxu0 %v1210
    %1288 = vmatpush2.bf16.msra.mxu0 %v1209
    %1289 = vmatprep.mubr.bf16.mxu0 %v812
    %1290 = vmatmul.mubr.bf16.gmra.mxu0 %v811
    %v1291 = vpop.f32.mrf.mxu0
    %v1292 = vadd.f32 %v1079, %v1291
    %v1293 = vpop.f32.mrf.mxu0
    %v1294 = vadd.f32 %v1081, %v1293
    %v1295 = vpop.f32.mrf.mxu0
    %v1296 = vadd.f32 %v1083, %v1295
    %v1297 = vpop.f32.mrf.mxu0
    %v1298 = vadd.f32 %v1085, %v1297
    %1299 = vmatprep.mubr.bf16.mxu0 %v814
    %1300 = vmatmul.mubr.bf16.gmra.mxu0 %v813
    %v1301 = vpop.f32.mrf.mxu0
    %v1302 = vadd.f32 %v1089, %v1301
    %v1303 = vpop.f32.mrf.mxu0
    %v1304 = vadd.f32 %v1091, %v1303
    %v1305 = vpop.f32.mrf.mxu0
    %v1306 = vadd.f32 %v1093, %v1305
    %v1307 = vpop.f32.mrf.mxu0
    %v1308 = vadd.f32 %v1095, %v1307
    %1309 = vdwg.mxu0
    %v1310 = vrot.slane %v744, 1
    %v1311 = vrot.slane %v745, 1
    %v1312 = vrot.slane %v746, 1
    %v1313 = vrot.slane %v747, 1
    %v1314 = vrot.slane %v748, 1
    %v1315 = vrot.slane %v749, 1
    %v1316 = vrot.slane %v750, 1
    %v1317 = vrot.slane %v751, 1
    %vm1318 = vcmp.lt.s32.totalorder %v761, 7
    %v1319 = vsel %vm1318, %v1314, %v1316
    %v1320 = vsel %vm1318, %v1315, %v1317
    %v1321 = vsel %vm1318, %v1312, %v1314
    %v1322 = vsel %vm1318, %v1313, %v1315
    %v1323 = vsel %vm1318, %v1310, %v1312
    %v1324 = vsel %vm1318, %v1311, %v1313
    %v1325 = vsel %vm1318, %v1316, %v1310
    %v1326 = vsel %vm1318, %v1317, %v1311
    %v1327 = vadd.s32 %v118, 1
    %v1328 = vadd.s32 %v119, 1
    %v1329 = vadd.s32 %v120, 1
    %v1330 = vadd.s32 %v121, 1
    %v1331 = vadd.s32 %v122, 1
    %v1332 = vadd.s32 %v123, 1
    %v1333 = vadd.s32 %v124, 1
    %v1334 = vadd.s32 %v125, 1
    %vm1335 = vcmp.ge.s32.totalorder %v1327, 0
    %vm1336 = vcmp.ge.s32.totalorder %v1328, 0
    %vm1337 = vcmp.ge.s32.totalorder %v1329, 0
    %vm1338 = vcmp.ge.s32.totalorder %v1330, 0
    %vm1339 = vcmp.ge.s32.totalorder %v1331, 0
    %vm1340 = vcmp.ge.s32.totalorder %v1332, 0
    %vm1341 = vcmp.ge.s32.totalorder %v1333, 0
    %vm1342 = vcmp.ge.s32.totalorder %v1334, 0
    %vm1343 = vcmp.lt.s32.totalorder %v1327, 16
    %vm1344 = vcmp.lt.s32.totalorder %v1328, 16
    %vm1345 = vcmp.lt.s32.totalorder %v1329, 16
    %vm1346 = vcmp.lt.s32.totalorder %v1330, 16
    %vm1347 = vcmp.lt.s32.totalorder %v1331, 16
    %vm1348 = vcmp.lt.s32.totalorder %v1332, 16
    %vm1349 = vcmp.lt.s32.totalorder %v1333, 16
    %vm1350 = vcmp.lt.s32.totalorder %v1334, 16
    %vm1351 = vmand %vm1335, %vm1343
    %vm1352 = vmand %vm1336, %vm1344
    %vm1353 = vmand %vm1337, %vm1345
    %vm1354 = vmand %vm1338, %vm1346
    %vm1355 = vmand %vm1339, %vm1347
    %vm1356 = vmand %vm1340, %vm1348
    %vm1357 = vmand %vm1341, %vm1349
    %vm1358 = vmand %vm1342, %vm1350
    %v1359 = vsel %vm1351, %v1323, 0.0
    %v1360 = vsel %vm1352, %v1324, 0.0
    %v1361 = vsel %vm1353, %v1321, 0.0
    %v1362 = vsel %vm1354, %v1322, 0.0
    %v1363 = vsel %vm1355, %v1319, 0.0
    %v1364 = vsel %vm1356, %v1320, 0.0
    %v1365 = vsel %vm1357, %v1325, 0.0
    %v1366 = vsel %vm1358, %v1326, 0.0
    %v1367 = vpack.c.bf16 %v1361, %v1359
    %v1368 = vpack.c.bf16 %v1362, %v1360
    %v1369 = vpack.c.bf16 %v1365, %v1363
    %v1370 = vpack.c.bf16 %v1366, %v1364
    %s1371 = scalar_lea.vmem %s8, 512
    %v1372 = vld [vmem:[%s1371] sm:$0xff]
    %v1373 = vld [vmem:[%s1371 + $0x8] sm:$0xff]
    %v1374 = vld [vmem:[%s1371 + $0x10] sm:$0xff]
    %v1375 = vld [vmem:[%s1371 + $0x18] sm:$0xff]
    %v1376 = vld [vmem:[%s1371 + $0x20] sm:$0xff]
    %v1377 = vld [vmem:[%s1371 + $0x28] sm:$0xff]
    %v1378 = vld [vmem:[%s1371 + $0x30] sm:$0xff]
    %v1379 = vld [vmem:[%s1371 + $0x38] sm:$0xff]
    %v1380 = vld [vmem:[%s1371 + $0x40] sm:$0xff]
    %v1381 = vld [vmem:[%s1371 + $0x48] sm:$0xff]
    %v1382 = vld [vmem:[%s1371 + $0x50] sm:$0xff]
    %v1383 = vld [vmem:[%s1371 + $0x58] sm:$0xff]
    %v1384 = vld [vmem:[%s1371 + $0x60] sm:$0xff]
    %v1385 = vld [vmem:[%s1371 + $0x68] sm:$0xff]
    %v1386 = vld [vmem:[%s1371 + $0x70] sm:$0xff]
    %v1387 = vld [vmem:[%s1371 + $0x78] sm:$0xff]
    %v1388 = vld [vmem:[%s1371 + $0x80] sm:$0xff]
    %v1389 = vld [vmem:[%s1371 + $0x88] sm:$0xff]
    %v1390 = vld [vmem:[%s1371 + $0x90] sm:$0xff]
    %v1391 = vld [vmem:[%s1371 + $0x98] sm:$0xff]
    %v1392 = vld [vmem:[%s1371 + $0xa0] sm:$0xff]
    %v1393 = vld [vmem:[%s1371 + $0xa8] sm:$0xff]
    %v1394 = vld [vmem:[%s1371 + $0xb0] sm:$0xff]
    %v1395 = vld [vmem:[%s1371 + $0xb8] sm:$0xff]
    %v1396 = vld [vmem:[%s1371 + $0xc0] sm:$0xff]
    %v1397 = vld [vmem:[%s1371 + $0xc8] sm:$0xff]
    %v1398 = vld [vmem:[%s1371 + $0xd0] sm:$0xff]
    %v1399 = vld [vmem:[%s1371 + $0xd8] sm:$0xff]
    %v1400 = vld [vmem:[%s1371 + $0xe0] sm:$0xff]
    %v1401 = vld [vmem:[%s1371 + $0xe8] sm:$0xff]
    %v1402 = vld [vmem:[%s1371 + $0xf0] sm:$0xff]
    %v1403 = vld [vmem:[%s1371 + $0xf8] sm:$0xff]
    %v1436 = vunpack.c.l.b16 %v1372
    %v1437 = vunpack.c.h.b16 %v1372
    %v1438 = vunpack.c.l.b16 %v1373
    %v1439 = vunpack.c.h.b16 %v1373
    %v1440 = vunpack.c.l.b16 %v1374
    %v1441 = vunpack.c.h.b16 %v1374
    %v1442 = vunpack.c.l.b16 %v1375
    %v1443 = vunpack.c.h.b16 %v1375
    %v1444 = vunpack.c.l.b16 %v1376
    %v1445 = vunpack.c.h.b16 %v1376
    %v1446 = vunpack.c.l.b16 %v1377
    %v1447 = vunpack.c.h.b16 %v1377
    %v1448 = vunpack.c.l.b16 %v1378
    %v1449 = vunpack.c.h.b16 %v1378
    %v1450 = vunpack.c.l.b16 %v1379
    %v1451 = vunpack.c.h.b16 %v1379
    %v1452 = vunpack.c.l.b16 %v1380
    %v1453 = vunpack.c.h.b16 %v1380
    %v1454 = vunpack.c.l.b16 %v1381
    %v1455 = vunpack.c.h.b16 %v1381
    %v1456 = vunpack.c.l.b16 %v1382
    %v1457 = vunpack.c.h.b16 %v1382
    %v1458 = vunpack.c.l.b16 %v1383
    %v1459 = vunpack.c.h.b16 %v1383
    %v1460 = vunpack.c.l.b16 %v1384
    %v1461 = vunpack.c.h.b16 %v1384
    %v1462 = vunpack.c.l.b16 %v1385
    %v1463 = vunpack.c.h.b16 %v1385
    %v1464 = vunpack.c.l.b16 %v1386
    %v1465 = vunpack.c.h.b16 %v1386
    %v1466 = vunpack.c.l.b16 %v1387
    %v1467 = vunpack.c.h.b16 %v1387
    %v1468 = vunpack.c.l.b16 %v1388
    %v1469 = vunpack.c.h.b16 %v1388
    %v1470 = vunpack.c.l.b16 %v1389
    %v1471 = vunpack.c.h.b16 %v1389
    %v1472 = vunpack.c.l.b16 %v1390
    %v1473 = vunpack.c.h.b16 %v1390
    %v1474 = vunpack.c.l.b16 %v1391
    %v1475 = vunpack.c.h.b16 %v1391
    %v1476 = vunpack.c.l.b16 %v1392
    %v1477 = vunpack.c.h.b16 %v1392
    %v1478 = vunpack.c.l.b16 %v1393
    %v1479 = vunpack.c.h.b16 %v1393
    %v1480 = vunpack.c.l.b16 %v1394
    %v1481 = vunpack.c.h.b16 %v1394
    %v1482 = vunpack.c.l.b16 %v1395
    %v1483 = vunpack.c.h.b16 %v1395
    %v1484 = vunpack.c.l.b16 %v1396
    %v1485 = vunpack.c.h.b16 %v1396
    %v1486 = vunpack.c.l.b16 %v1397
    %v1487 = vunpack.c.h.b16 %v1397
    %v1488 = vunpack.c.l.b16 %v1398
    %v1489 = vunpack.c.h.b16 %v1398
    %v1490 = vunpack.c.l.b16 %v1399
    %v1491 = vunpack.c.h.b16 %v1399
    %v1492 = vunpack.c.l.b16 %v1400
    %v1493 = vunpack.c.h.b16 %v1400
    %v1494 = vunpack.c.l.b16 %v1401
    %v1495 = vunpack.c.h.b16 %v1401
    %v1496 = vunpack.c.l.b16 %v1402
    %v1497 = vunpack.c.h.b16 %v1402
    %v1498 = vunpack.c.l.b16 %v1403
    %v1499 = vunpack.c.h.b16 %v1403
    %v1500 = vpack.c.b16 %v1438, %v1436
    %v1501 = vpack.c.b16 %v1439, %v1437
    %v1502 = vpack.c.b16 %v1442, %v1440
    %v1503 = vpack.c.b16 %v1443, %v1441
    %v1504 = vpack.c.b16 %v1446, %v1444
    %v1505 = vpack.c.b16 %v1447, %v1445
    %v1506 = vpack.c.b16 %v1450, %v1448
    %v1507 = vpack.c.b16 %v1451, %v1449
    %v1508 = vpack.c.b16 %v1454, %v1452
    %v1509 = vpack.c.b16 %v1455, %v1453
    %v1510 = vpack.c.b16 %v1458, %v1456
    %v1511 = vpack.c.b16 %v1459, %v1457
    %v1512 = vpack.c.b16 %v1462, %v1460
    %v1513 = vpack.c.b16 %v1463, %v1461
    %v1514 = vpack.c.b16 %v1466, %v1464
    %v1515 = vpack.c.b16 %v1467, %v1465
    %v1516 = vpack.c.b16 %v1470, %v1468
    %v1517 = vpack.c.b16 %v1471, %v1469
    %v1518 = vpack.c.b16 %v1474, %v1472
    %v1519 = vpack.c.b16 %v1475, %v1473
    %v1520 = vpack.c.b16 %v1478, %v1476
    %v1521 = vpack.c.b16 %v1479, %v1477
    %v1522 = vpack.c.b16 %v1482, %v1480
    %v1523 = vpack.c.b16 %v1483, %v1481
    %v1524 = vpack.c.b16 %v1486, %v1484
    %v1525 = vpack.c.b16 %v1487, %v1485
    %v1526 = vpack.c.b16 %v1490, %v1488
    %v1527 = vpack.c.b16 %v1491, %v1489
    %v1528 = vpack.c.b16 %v1494, %v1492
    %v1529 = vpack.c.b16 %v1495, %v1493
    %v1530 = vpack.c.b16 %v1498, %v1496
    %v1531 = vpack.c.b16 %v1499, %v1497
    %1564 = vmatprep.subr.bf16.mxu0 %v1515
    %1565 = vmatpush1.bf16.msra.mxu0 %v1514
    %1566 = vmatprep.subr.bf16.mxu0 %v1513
    %1567 = vmatpush1.bf16.msra.mxu0 %v1512
    %1568 = vmatprep.subr.bf16.mxu0 %v1511
    %1569 = vmatpush1.bf16.msra.mxu0 %v1510
    %1570 = vmatprep.subr.bf16.mxu0 %v1509
    %1571 = vmatpush1.bf16.msra.mxu0 %v1508
    %1572 = vmatprep.subr.bf16.mxu0 %v1507
    %1573 = vmatpush1.bf16.msra.mxu0 %v1506
    %1574 = vmatprep.subr.bf16.mxu0 %v1505
    %1575 = vmatpush1.bf16.msra.mxu0 %v1504
    %1576 = vmatprep.subr.bf16.mxu0 %v1503
    %1577 = vmatpush1.bf16.msra.mxu0 %v1502
    %1578 = vmatprep.subr.bf16.mxu0 %v1501
    %1579 = vmatpush1.bf16.msra.mxu0 %v1500
    %1580 = vmatprep.subr.bf16.mxu0 %v1531
    %1581 = vmatpush2.bf16.msra.mxu0 %v1530
    %1582 = vmatprep.subr.bf16.mxu0 %v1529
    %1583 = vmatpush2.bf16.msra.mxu0 %v1528
    %1584 = vmatprep.subr.bf16.mxu0 %v1527
    %1585 = vmatpush2.bf16.msra.mxu0 %v1526
    %1586 = vmatprep.subr.bf16.mxu0 %v1525
    %1587 = vmatpush2.bf16.msra.mxu0 %v1524
    %1588 = vmatprep.subr.bf16.mxu0 %v1523
    %1589 = vmatpush2.bf16.msra.mxu0 %v1522
    %1590 = vmatprep.subr.bf16.mxu0 %v1521
    %1591 = vmatpush2.bf16.msra.mxu0 %v1520
    %1592 = vmatprep.subr.bf16.mxu0 %v1519
    %1593 = vmatpush2.bf16.msra.mxu0 %v1518
    %1594 = vmatprep.subr.bf16.mxu0 %v1517
    %1595 = vmatpush2.bf16.msra.mxu0 %v1516
    %1596 = vmatprep.mubr.bf16.mxu0 %v1368
    %1597 = vmatmul.mubr.bf16.gmra.mxu0 %v1367
    %v1598 = vpop.f32.mrf.mxu0
    %v1599 = vadd.f32 0.0, %v1598
    %v1600 = vpop.f32.mrf.mxu0
    %v1601 = vadd.f32 0.0, %v1600
    %v1602 = vpop.f32.mrf.mxu0
    %v1603 = vadd.f32 0.0, %v1602
    %v1604 = vpop.f32.mrf.mxu0
    %v1605 = vadd.f32 0.0, %v1604
    %1606 = vmatprep.mubr.bf16.mxu0 %v1370
    %1607 = vmatmul.mubr.bf16.gmra.mxu0 %v1369
    %v1608 = vpop.f32.mrf.mxu0
    %v1609 = vadd.f32 0.0, %v1608
    %v1610 = vpop.f32.mrf.mxu0
    %v1611 = vadd.f32 0.0, %v1610
    %v1612 = vpop.f32.mrf.mxu0
    %v1613 = vadd.f32 0.0, %v1612
    %v1614 = vpop.f32.mrf.mxu0
    %v1615 = vadd.f32 0.0, %v1614
    %1616 = vdwg.mxu0
    %v1617 = vadd.f32 %v1292, %v1599
    %v1618 = vadd.f32 %v1294, %v1601
    %v1619 = vadd.f32 %v1296, %v1603
    %v1620 = vadd.f32 %v1298, %v1605
    %v1621 = vadd.f32 %v1302, %v1609
    %v1622 = vadd.f32 %v1304, %v1611
    %v1623 = vadd.f32 %v1306, %v1613
    %v1624 = vadd.f32 %v1308, %v1615
    %v1625 = vld [vmem:[%s9] sm:$0x3]
    %v1627 = vlaneseq
    %v1628 = vshrl.u32 %v1627, 7
    %v1629 = vsub.s32 0, %v1628
    %v1630 = vrot.slane %v1625, %v1629
    %v1631 = vlaneseq
    %v1632 = vshrl.u32 %v1631, 7
    %v1633 = vsub.s32 1, %v1632
    %v1634 = vrot.slane %v1625, %v1633
    %v1637 = vadd.f32 %v1617, %v1630
    %v1638 = vadd.f32 %v1618, %v1634
    %v1639 = vadd.f32 %v1619, %v1630
    %v1640 = vadd.f32 %v1620, %v1634
    %v1641 = vadd.f32 %v1621, %v1630
    %v1642 = vadd.f32 %v1622, %v1634
    %v1643 = vadd.f32 %v1623, %v1630
    %v1644 = vadd.f32 %v1624, %v1634
    %v1645 = vrot.slane %v1637, 6
    %v1646 = vrot.slane %v1638, 6
    %v1647 = vrot.slane %v1639, 6
    %v1648 = vrot.slane %v1640, 6
    %v1649 = vrot.slane %v1641, 6
    %v1650 = vrot.slane %v1642, 6
    %v1651 = vrot.slane %v1643, 6
    %v1652 = vrot.slane %v1644, 6
    %vm1653 = vcmp.lt.s32.totalorder %v761, 2
    %v1654 = vsel %vm1653, %v1649, %v1651
    %v1655 = vsel %vm1653, %v1650, %v1652
    %v1656 = vsel %vm1653, %v1647, %v1649
    %v1657 = vsel %vm1653, %v1648, %v1650
    %v1658 = vsel %vm1653, %v1645, %v1647
    %v1659 = vsel %vm1653, %v1646, %v1648
    %v1660 = vsel %vm1653, %v1651, %v1645
    %v1661 = vsel %vm1653, %v1652, %v1646
    %v1662 = vadd.s32 %v118, 4294967294
    %v1663 = vadd.s32 %v119, 4294967294
    %v1664 = vadd.s32 %v120, 4294967294
    %v1665 = vadd.s32 %v121, 4294967294
    %v1666 = vadd.s32 %v122, 4294967294
    %v1667 = vadd.s32 %v123, 4294967294
    %v1668 = vadd.s32 %v124, 4294967294
    %v1669 = vadd.s32 %v125, 4294967294
    %vm1670 = vcmp.ge.s32.totalorder %v1662, 0
    %vm1671 = vcmp.ge.s32.totalorder %v1663, 0
    %vm1672 = vcmp.ge.s32.totalorder %v1664, 0
    %vm1673 = vcmp.ge.s32.totalorder %v1665, 0
    %vm1674 = vcmp.ge.s32.totalorder %v1666, 0
    %vm1675 = vcmp.ge.s32.totalorder %v1667, 0
    %vm1676 = vcmp.ge.s32.totalorder %v1668, 0
    %vm1677 = vcmp.ge.s32.totalorder %v1669, 0
    %vm1678 = vcmp.lt.s32.totalorder %v1662, 16
    %vm1679 = vcmp.lt.s32.totalorder %v1663, 16
    %vm1680 = vcmp.lt.s32.totalorder %v1664, 16
    %vm1681 = vcmp.lt.s32.totalorder %v1665, 16
    %vm1682 = vcmp.lt.s32.totalorder %v1666, 16
    %vm1683 = vcmp.lt.s32.totalorder %v1667, 16
    %vm1684 = vcmp.lt.s32.totalorder %v1668, 16
    %vm1685 = vcmp.lt.s32.totalorder %v1669, 16
    %vm1686 = vmand %vm1670, %vm1678
    %vm1687 = vmand %vm1671, %vm1679
    %vm1688 = vmand %vm1672, %vm1680
    %vm1689 = vmand %vm1673, %vm1681
    %vm1690 = vmand %vm1674, %vm1682
    %vm1691 = vmand %vm1675, %vm1683
    %vm1692 = vmand %vm1676, %vm1684
    %vm1693 = vmand %vm1677, %vm1685
    %v1694 = vsel %vm1686, %v1660, 0.0
    %v1695 = vsel %vm1687, %v1661, 0.0
    %v1696 = vsel %vm1688, %v1658, 0.0
    %v1697 = vsel %vm1689, %v1659, 0.0
    %v1698 = vsel %vm1690, %v1656, 0.0
    %v1699 = vsel %vm1691, %v1657, 0.0
    %v1700 = vsel %vm1692, %v1654, 0.0
    %v1701 = vsel %vm1693, %v1655, 0.0
    %v1702 = vpack.c.bf16 %v1696, %v1694
    %v1703 = vpack.c.bf16 %v1697, %v1695
    %v1704 = vpack.c.bf16 %v1700, %v1698
    %v1705 = vpack.c.bf16 %v1701, %v1699
    %v1706 = vld [vmem:[#allocation4] sm:$0xf]
    %v1707 = vld [vmem:[#allocation4 + $0x4] sm:$0xf]
    %v1708 = vld [vmem:[#allocation4 + $0x8] sm:$0xf]
    %v1709 = vld [vmem:[#allocation4 + $0xc] sm:$0xf]
    %v1710 = vld [vmem:[#allocation4 + $0x10] sm:$0xf]
    %v1711 = vld [vmem:[#allocation4 + $0x14] sm:$0xf]
    %v1712 = vld [vmem:[#allocation4 + $0x18] sm:$0xf]
    %v1713 = vld [vmem:[#allocation4 + $0x1c] sm:$0xf]
    %v1714 = vld [vmem:[#allocation4 + $0x20] sm:$0xf]
    %v1715 = vld [vmem:[#allocation4 + $0x24] sm:$0xf]
    %v1716 = vld [vmem:[#allocation4 + $0x28] sm:$0xf]
    %v1717 = vld [vmem:[#allocation4 + $0x2c] sm:$0xf]
    %v1718 = vld [vmem:[#allocation4 + $0x30] sm:$0xf]
    %v1719 = vld [vmem:[#allocation4 + $0x34] sm:$0xf]
    %v1720 = vld [vmem:[#allocation4 + $0x38] sm:$0xf]
    %v1721 = vld [vmem:[#allocation4 + $0x3c] sm:$0xf]
    %v1722 = vld [vmem:[#allocation4 + $0x40] sm:$0xf]
    %v1723 = vld [vmem:[#allocation4 + $0x44] sm:$0xf]
    %v1724 = vld [vmem:[#allocation4 + $0x48] sm:$0xf]
    %v1725 = vld [vmem:[#allocation4 + $0x4c] sm:$0xf]
    %v1726 = vld [vmem:[#allocation4 + $0x50] sm:$0xf]
    %v1727 = vld [vmem:[#allocation4 + $0x54] sm:$0xf]
    %v1728 = vld [vmem:[#allocation4 + $0x58] sm:$0xf]
    %v1729 = vld [vmem:[#allocation4 + $0x5c] sm:$0xf]
    %v1730 = vld [vmem:[#allocation4 + $0x60] sm:$0xf]
    %v1731 = vld [vmem:[#allocation4 + $0x64] sm:$0xf]
    %v1732 = vld [vmem:[#allocation4 + $0x68] sm:$0xf]
    %v1733 = vld [vmem:[#allocation4 + $0x6c] sm:$0xf]
    %v1734 = vld [vmem:[#allocation4 + $0x70] sm:$0xf]
    %v1735 = vld [vmem:[#allocation4 + $0x74] sm:$0xf]
    %v1736 = vld [vmem:[#allocation4 + $0x78] sm:$0xf]
    %v1737 = vld [vmem:[#allocation4 + $0x7c] sm:$0xf]
    %v1738 = vpack.c.bf16 %v1639, %v1637
    %v1739 = vpack.c.bf16 %v1640, %v1638
    %v1740 = vpack.c.bf16 %v1643, %v1641
    %v1741 = vpack.c.bf16 %v1644, %v1642
    %s1742 = scalar_lea.vmem [#allocation4], 128
    %v1743 = vld [vmem:[%s1742] sm:$0xf]
    %v1744 = vld [vmem:[%s1742 + $0x4] sm:$0xf]
    %v1745 = vld [vmem:[%s1742 + $0x8] sm:$0xf]
    %v1746 = vld [vmem:[%s1742 + $0xc] sm:$0xf]
    %v1747 = vld [vmem:[%s1742 + $0x10] sm:$0xf]
    %v1748 = vld [vmem:[%s1742 + $0x14] sm:$0xf]
    %v1749 = vld [vmem:[%s1742 + $0x18] sm:$0xf]
    %v1750 = vld [vmem:[%s1742 + $0x1c] sm:$0xf]
    %v1751 = vld [vmem:[%s1742 + $0x20] sm:$0xf]
    %v1752 = vld [vmem:[%s1742 + $0x24] sm:$0xf]
    %v1753 = vld [vmem:[%s1742 + $0x28] sm:$0xf]
    %v1754 = vld [vmem:[%s1742 + $0x2c] sm:$0xf]
    %v1755 = vld [vmem:[%s1742 + $0x30] sm:$0xf]
    %v1756 = vld [vmem:[%s1742 + $0x34] sm:$0xf]
    %v1757 = vld [vmem:[%s1742 + $0x38] sm:$0xf]
    %v1758 = vld [vmem:[%s1742 + $0x3c] sm:$0xf]
    %v1759 = vld [vmem:[%s1742 + $0x40] sm:$0xf]
    %v1760 = vld [vmem:[%s1742 + $0x44] sm:$0xf]
    %v1761 = vld [vmem:[%s1742 + $0x48] sm:$0xf]
    %v1762 = vld [vmem:[%s1742 + $0x4c] sm:$0xf]
    %v1763 = vld [vmem:[%s1742 + $0x50] sm:$0xf]
    %v1764 = vld [vmem:[%s1742 + $0x54] sm:$0xf]
    %v1765 = vld [vmem:[%s1742 + $0x58] sm:$0xf]
    %v1766 = vld [vmem:[%s1742 + $0x5c] sm:$0xf]
    %v1767 = vld [vmem:[%s1742 + $0x60] sm:$0xf]
    %v1768 = vld [vmem:[%s1742 + $0x64] sm:$0xf]
    %v1769 = vld [vmem:[%s1742 + $0x68] sm:$0xf]
    %v1770 = vld [vmem:[%s1742 + $0x6c] sm:$0xf]
    %v1771 = vld [vmem:[%s1742 + $0x70] sm:$0xf]
    %v1772 = vld [vmem:[%s1742 + $0x74] sm:$0xf]
    %v1773 = vld [vmem:[%s1742 + $0x78] sm:$0xf]
    %v1774 = vld [vmem:[%s1742 + $0x7c] sm:$0xf]
    %v1807 = vunpack.c.l.b16 %v1743
    %v1808 = vunpack.c.l.b16 %v1744
    %v1809 = vunpack.c.l.b16 %v1745
    %v1810 = vunpack.c.l.b16 %v1746
    %v1811 = vunpack.c.l.b16 %v1747
    %v1812 = vunpack.c.l.b16 %v1748
    %v1813 = vunpack.c.l.b16 %v1749
    %v1814 = vunpack.c.l.b16 %v1750
    %v1815 = vunpack.c.l.b16 %v1751
    %v1816 = vunpack.c.l.b16 %v1752
    %v1817 = vunpack.c.l.b16 %v1753
    %v1818 = vunpack.c.l.b16 %v1754
    %v1819 = vunpack.c.l.b16 %v1755
    %v1820 = vunpack.c.l.b16 %v1756
    %v1821 = vunpack.c.l.b16 %v1757
    %v1822 = vunpack.c.l.b16 %v1758
    %v1823 = vunpack.c.l.b16 %v1759
    %v1824 = vunpack.c.l.b16 %v1760
    %v1825 = vunpack.c.l.b16 %v1761
    %v1826 = vunpack.c.l.b16 %v1762
    %v1827 = vunpack.c.l.b16 %v1763
    %v1828 = vunpack.c.l.b16 %v1764
    %v1829 = vunpack.c.l.b16 %v1765
    %v1830 = vunpack.c.l.b16 %v1766
    %v1831 = vunpack.c.l.b16 %v1767
    %v1832 = vunpack.c.l.b16 %v1768
    %v1833 = vunpack.c.l.b16 %v1769
    %v1834 = vunpack.c.l.b16 %v1770
    %v1835 = vunpack.c.l.b16 %v1771
    %v1836 = vunpack.c.l.b16 %v1772
    %v1837 = vunpack.c.l.b16 %v1773
    %v1838 = vunpack.c.l.b16 %v1774
    %v1839 = vpack.c.b16 %v1808, %v1807
    %v1840 = vpack.c.b16 %v1810, %v1809
    %v1841 = vpack.c.b16 %v1812, %v1811
    %v1842 = vpack.c.b16 %v1814, %v1813
    %v1843 = vpack.c.b16 %v1816, %v1815
    %v1844 = vpack.c.b16 %v1818, %v1817
    %v1845 = vpack.c.b16 %v1820, %v1819
    %v1846 = vpack.c.b16 %v1822, %v1821
    %v1847 = vpack.c.b16 %v1824, %v1823
    %v1848 = vpack.c.b16 %v1826, %v1825
    %v1849 = vpack.c.b16 %v1828, %v1827
    %v1850 = vpack.c.b16 %v1830, %v1829
    %v1851 = vpack.c.b16 %v1832, %v1831
    %v1852 = vpack.c.b16 %v1834, %v1833
    %v1853 = vpack.c.b16 %v1836, %v1835
    %v1854 = vpack.c.b16 %v1838, %v1837
    %1871 = vmatprep.subr.bf16.mxu0 0
    %1872 = vmatpush1.bf16.msra.mxu0 %v1846
    %1873 = vmatprep.subr.bf16.mxu0 0
    %1874 = vmatpush1.bf16.msra.mxu0 %v1845
    %1875 = vmatprep.subr.bf16.mxu0 0
    %1876 = vmatpush1.bf16.msra.mxu0 %v1844
    %1877 = vmatprep.subr.bf16.mxu0 0
    %1878 = vmatpush1.bf16.msra.mxu0 %v1843
    %1879 = vmatprep.subr.bf16.mxu0 0
    %1880 = vmatpush1.bf16.msra.mxu0 %v1842
    %1881 = vmatprep.subr.bf16.mxu0 0
    %1882 = vmatpush1.bf16.msra.mxu0 %v1841
    %1883 = vmatprep.subr.bf16.mxu0 0
    %1884 = vmatpush1.bf16.msra.mxu0 %v1840
    %1885 = vmatprep.subr.bf16.mxu0 0
    %1886 = vmatpush1.bf16.msra.mxu0 %v1839
    %1887 = vmatprep.subr.bf16.mxu0 0
    %1888 = vmatpush2.bf16.msra.mxu0 %v1854
    %1889 = vmatprep.subr.bf16.mxu0 0
    %1890 = vmatpush2.bf16.msra.mxu0 %v1853
    %1891 = vmatprep.subr.bf16.mxu0 0
    %1892 = vmatpush2.bf16.msra.mxu0 %v1852
    %1893 = vmatprep.subr.bf16.mxu0 0
    %1894 = vmatpush2.bf16.msra.mxu0 %v1851
    %1895 = vmatprep.subr.bf16.mxu0 0
    %1896 = vmatpush2.bf16.msra.mxu0 %v1850
    %1897 = vmatprep.subr.bf16.mxu0 0
    %1898 = vmatpush2.bf16.msra.mxu0 %v1849
    %1899 = vmatprep.subr.bf16.mxu0 0
    %1900 = vmatpush2.bf16.msra.mxu0 %v1848
    %1901 = vmatprep.subr.bf16.mxu0 0
    %1902 = vmatpush2.bf16.msra.mxu0 %v1847
    %1903 = vmatprep.mubr.bf16.mxu0 %v1739
    %1904 = vmatmul.mubr.bf16.gmra.mxu0 %v1738
    %v1905 = vpop.f32.mrf.mxu0
    %v1906 = vadd.f32 0.0, %v1905
    %v1907 = vpop.f32.mrf.mxu0
    %v1908 = vpop.f32.mrf.mxu0
    %v1909 = vadd.f32 0.0, %v1908
    %v1910 = vpop.f32.mrf.mxu0
    %1911 = vmatprep.mubr.bf16.mxu0 %v1741
    %1912 = vmatmul.mubr.bf16.gmra.mxu0 %v1740
    %v1913 = vpop.f32.mrf.mxu0
    %v1914 = vadd.f32 0.0, %v1913
    %v1915 = vpop.f32.mrf.mxu0
    %v1916 = vpop.f32.mrf.mxu0
    %v1917 = vadd.f32 0.0, %v1916
    %v1918 = vpop.f32.mrf.mxu0
    %1919 = vdwg.mxu0
    %v1952 = vunpack.c.l.b16 %v1706
    %v1953 = vunpack.c.l.b16 %v1707
    %v1954 = vunpack.c.l.b16 %v1708
    %v1955 = vunpack.c.l.b16 %v1709
    %v1956 = vunpack.c.l.b16 %v1710
    %v1957 = vunpack.c.l.b16 %v1711
    %v1958 = vunpack.c.l.b16 %v1712
    %v1959 = vunpack.c.l.b16 %v1713
    %v1960 = vunpack.c.l.b16 %v1714
    %v1961 = vunpack.c.l.b16 %v1715
    %v1962 = vunpack.c.l.b16 %v1716
    %v1963 = vunpack.c.l.b16 %v1717
    %v1964 = vunpack.c.l.b16 %v1718
    %v1965 = vunpack.c.l.b16 %v1719
    %v1966 = vunpack.c.l.b16 %v1720
    %v1967 = vunpack.c.l.b16 %v1721
    %v1968 = vunpack.c.l.b16 %v1722
    %v1969 = vunpack.c.l.b16 %v1723
    %v1970 = vunpack.c.l.b16 %v1724
    %v1971 = vunpack.c.l.b16 %v1725
    %v1972 = vunpack.c.l.b16 %v1726
    %v1973 = vunpack.c.l.b16 %v1727
    %v1974 = vunpack.c.l.b16 %v1728
    %v1975 = vunpack.c.l.b16 %v1729
    %v1976 = vunpack.c.l.b16 %v1730
    %v1977 = vunpack.c.l.b16 %v1731
    %v1978 = vunpack.c.l.b16 %v1732
    %v1979 = vunpack.c.l.b16 %v1733
    %v1980 = vunpack.c.l.b16 %v1734
    %v1981 = vunpack.c.l.b16 %v1735
    %v1982 = vunpack.c.l.b16 %v1736
    %v1983 = vunpack.c.l.b16 %v1737
    %v1984 = vpack.c.b16 %v1953, %v1952
    %v1985 = vpack.c.b16 %v1955, %v1954
    %v1986 = vpack.c.b16 %v1957, %v1956
    %v1987 = vpack.c.b16 %v1959, %v1958
    %v1988 = vpack.c.b16 %v1961, %v1960
    %v1989 = vpack.c.b16 %v1963, %v1962
    %v1990 = vpack.c.b16 %v1965, %v1964
    %v1991 = vpack.c.b16 %v1967, %v1966
    %v1992 = vpack.c.b16 %v1969, %v1968
    %v1993 = vpack.c.b16 %v1971, %v1970
    %v1994 = vpack.c.b16 %v1973, %v1972
    %v1995 = vpack.c.b16 %v1975, %v1974
    %v1996 = vpack.c.b16 %v1977, %v1976
    %v1997 = vpack.c.b16 %v1979, %v1978
    %v1998 = vpack.c.b16 %v1981, %v1980
    %v1999 = vpack.c.b16 %v1983, %v1982
    %2016 = vmatprep.subr.bf16.mxu0 0
    %2017 = vmatpush1.bf16.msra.mxu0 %v1991
    %2018 = vmatprep.subr.bf16.mxu0 0
    %2019 = vmatpush1.bf16.msra.mxu0 %v1990
    %2020 = vmatprep.subr.bf16.mxu0 0
    %2021 = vmatpush1.bf16.msra.mxu0 %v1989
    %2022 = vmatprep.subr.bf16.mxu0 0
    %2023 = vmatpush1.bf16.msra.mxu0 %v1988
    %2024 = vmatprep.subr.bf16.mxu0 0
    %2025 = vmatpush1.bf16.msra.mxu0 %v1987
    %2026 = vmatprep.subr.bf16.mxu0 0
    %2027 = vmatpush1.bf16.msra.mxu0 %v1986
    %2028 = vmatprep.subr.bf16.mxu0 0
    %2029 = vmatpush1.bf16.msra.mxu0 %v1985
    %2030 = vmatprep.subr.bf16.mxu0 0
    %2031 = vmatpush1.bf16.msra.mxu0 %v1984
    %2032 = vmatprep.subr.bf16.mxu0 0
    %2033 = vmatpush2.bf16.msra.mxu0 %v1999
    %2034 = vmatprep.subr.bf16.mxu0 0
    %2035 = vmatpush2.bf16.msra.mxu0 %v1998
    %2036 = vmatprep.subr.bf16.mxu0 0
    %2037 = vmatpush2.bf16.msra.mxu0 %v1997
    %2038 = vmatprep.subr.bf16.mxu0 0
    %2039 = vmatpush2.bf16.msra.mxu0 %v1996
    %2040 = vmatprep.subr.bf16.mxu0 0
    %2041 = vmatpush2.bf16.msra.mxu0 %v1995
    %2042 = vmatprep.subr.bf16.mxu0 0
    %2043 = vmatpush2.bf16.msra.mxu0 %v1994
    %2044 = vmatprep.subr.bf16.mxu0 0
    %2045 = vmatpush2.bf16.msra.mxu0 %v1993
    %2046 = vmatprep.subr.bf16.mxu0 0
    %2047 = vmatpush2.bf16.msra.mxu0 %v1992
    %2048 = vmatprep.mubr.bf16.mxu0 %v1703
    %2049 = vmatmul.mubr.bf16.gmra.mxu0 %v1702
    %v2050 = vpop.f32.mrf.mxu0
    %v2051 = vadd.f32 %v1906, %v2050
    %v2052 = vpop.f32.mrf.mxu0
    %v2053 = vpop.f32.mrf.mxu0
    %v2054 = vadd.f32 %v1909, %v2053
    %v2055 = vpop.f32.mrf.mxu0
    %2056 = vmatprep.mubr.bf16.mxu0 %v1705
    %2057 = vmatmul.mubr.bf16.gmra.mxu0 %v1704
    %v2058 = vpop.f32.mrf.mxu0
    %v2059 = vadd.f32 %v1914, %v2058
    %v2060 = vpop.f32.mrf.mxu0
    %v2061 = vpop.f32.mrf.mxu0
    %v2062 = vadd.f32 %v1917, %v2061
    %v2063 = vpop.f32.mrf.mxu0
    %2064 = vdwg.mxu0
    %v2065 = vrot.slane %v1637, 2
    %v2066 = vrot.slane %v1638, 2
    %v2067 = vrot.slane %v1639, 2
    %v2068 = vrot.slane %v1640, 2
    %v2069 = vrot.slane %v1641, 2
    %v2070 = vrot.slane %v1642, 2
    %v2071 = vrot.slane %v1643, 2
    %v2072 = vrot.slane %v1644, 2
    %vm2073 = vcmp.lt.s32.totalorder %v761, 6
    %v2074 = vsel %vm2073, %v2069, %v2071
    %v2075 = vsel %vm2073, %v2070, %v2072
    %v2076 = vsel %vm2073, %v2067, %v2069
    %v2077 = vsel %vm2073, %v2068, %v2070
    %v2078 = vsel %vm2073, %v2065, %v2067
    %v2079 = vsel %vm2073, %v2066, %v2068
    %v2080 = vsel %vm2073, %v2071, %v2065
    %v2081 = vsel %vm2073, %v2072, %v2066
    %v2082 = vadd.s32 %v118, 2
    %v2083 = vadd.s32 %v119, 2
    %v2084 = vadd.s32 %v120, 2
    %v2085 = vadd.s32 %v121, 2
    %v2086 = vadd.s32 %v122, 2
    %v2087 = vadd.s32 %v123, 2
    %v2088 = vadd.s32 %v124, 2
    %v2089 = vadd.s32 %v125, 2
    %vm2090 = vcmp.ge.s32.totalorder %v2082, 0
    %vm2091 = vcmp.ge.s32.totalorder %v2083, 0
    %vm2092 = vcmp.ge.s32.totalorder %v2084, 0
    %vm2093 = vcmp.ge.s32.totalorder %v2085, 0
    %vm2094 = vcmp.ge.s32.totalorder %v2086, 0
    %vm2095 = vcmp.ge.s32.totalorder %v2087, 0
    %vm2096 = vcmp.ge.s32.totalorder %v2088, 0
    %vm2097 = vcmp.ge.s32.totalorder %v2089, 0
    %vm2098 = vcmp.lt.s32.totalorder %v2082, 16
    %vm2099 = vcmp.lt.s32.totalorder %v2083, 16
    %vm2100 = vcmp.lt.s32.totalorder %v2084, 16
    %vm2101 = vcmp.lt.s32.totalorder %v2085, 16
    %vm2102 = vcmp.lt.s32.totalorder %v2086, 16
    %vm2103 = vcmp.lt.s32.totalorder %v2087, 16
    %vm2104 = vcmp.lt.s32.totalorder %v2088, 16
    %vm2105 = vcmp.lt.s32.totalorder %v2089, 16
    %vm2106 = vmand %vm2090, %vm2098
    %vm2107 = vmand %vm2091, %vm2099
    %vm2108 = vmand %vm2092, %vm2100
    %vm2109 = vmand %vm2093, %vm2101
    %vm2110 = vmand %vm2094, %vm2102
    %vm2111 = vmand %vm2095, %vm2103
    %vm2112 = vmand %vm2096, %vm2104
    %vm2113 = vmand %vm2097, %vm2105
    %v2114 = vsel %vm2106, %v2078, 0.0
    %v2115 = vsel %vm2107, %v2079, 0.0
    %v2116 = vsel %vm2108, %v2076, 0.0
    %v2117 = vsel %vm2109, %v2077, 0.0
    %v2118 = vsel %vm2110, %v2074, 0.0
    %v2119 = vsel %vm2111, %v2075, 0.0
    %v2120 = vsel %vm2112, %v2080, 0.0
    %v2121 = vsel %vm2113, %v2081, 0.0
    %v2122 = vpack.c.bf16 %v2116, %v2114
    %v2123 = vpack.c.bf16 %v2117, %v2115
    %v2124 = vpack.c.bf16 %v2120, %v2118
    %v2125 = vpack.c.bf16 %v2121, %v2119
    %s2126 = scalar_lea.vmem [#allocation4], 256
    %v2127 = vld [vmem:[%s2126] sm:$0xf]
    %v2128 = vld [vmem:[%s2126 + $0x4] sm:$0xf]
    %v2129 = vld [vmem:[%s2126 + $0x8] sm:$0xf]
    %v2130 = vld [vmem:[%s2126 + $0xc] sm:$0xf]
    %v2131 = vld [vmem:[%s2126 + $0x10] sm:$0xf]
    %v2132 = vld [vmem:[%s2126 + $0x14] sm:$0xf]
    %v2133 = vld [vmem:[%s2126 + $0x18] sm:$0xf]
    %v2134 = vld [vmem:[%s2126 + $0x1c] sm:$0xf]
    %v2135 = vld [vmem:[%s2126 + $0x20] sm:$0xf]
    %v2136 = vld [vmem:[%s2126 + $0x24] sm:$0xf]
    %v2137 = vld [vmem:[%s2126 + $0x28] sm:$0xf]
    %v2138 = vld [vmem:[%s2126 + $0x2c] sm:$0xf]
    %v2139 = vld [vmem:[%s2126 + $0x30] sm:$0xf]
    %v2140 = vld [vmem:[%s2126 + $0x34] sm:$0xf]
    %v2141 = vld [vmem:[%s2126 + $0x38] sm:$0xf]
    %v2142 = vld [vmem:[%s2126 + $0x3c] sm:$0xf]
    %v2143 = vld [vmem:[%s2126 + $0x40] sm:$0xf]
    %v2144 = vld [vmem:[%s2126 + $0x44] sm:$0xf]
    %v2145 = vld [vmem:[%s2126 + $0x48] sm:$0xf]
    %v2146 = vld [vmem:[%s2126 + $0x4c] sm:$0xf]
    %v2147 = vld [vmem:[%s2126 + $0x50] sm:$0xf]
    %v2148 = vld [vmem:[%s2126 + $0x54] sm:$0xf]
    %v2149 = vld [vmem:[%s2126 + $0x58] sm:$0xf]
    %v2150 = vld [vmem:[%s2126 + $0x5c] sm:$0xf]
    %v2151 = vld [vmem:[%s2126 + $0x60] sm:$0xf]
    %v2152 = vld [vmem:[%s2126 + $0x64] sm:$0xf]
    %v2153 = vld [vmem:[%s2126 + $0x68] sm:$0xf]
    %v2154 = vld [vmem:[%s2126 + $0x6c] sm:$0xf]
    %v2155 = vld [vmem:[%s2126 + $0x70] sm:$0xf]
    %v2156 = vld [vmem:[%s2126 + $0x74] sm:$0xf]
    %v2157 = vld [vmem:[%s2126 + $0x78] sm:$0xf]
    %v2158 = vld [vmem:[%s2126 + $0x7c] sm:$0xf]
    %v2191 = vunpack.c.l.b16 %v2127
    %v2192 = vunpack.c.l.b16 %v2128
    %v2193 = vunpack.c.l.b16 %v2129
    %v2194 = vunpack.c.l.b16 %v2130
    %v2195 = vunpack.c.l.b16 %v2131
    %v2196 = vunpack.c.l.b16 %v2132
    %v2197 = vunpack.c.l.b16 %v2133
    %v2198 = vunpack.c.l.b16 %v2134
    %v2199 = vunpack.c.l.b16 %v2135
    %v2200 = vunpack.c.l.b16 %v2136
    %v2201 = vunpack.c.l.b16 %v2137
    %v2202 = vunpack.c.l.b16 %v2138
    %v2203 = vunpack.c.l.b16 %v2139
    %v2204 = vunpack.c.l.b16 %v2140
    %v2205 = vunpack.c.l.b16 %v2141
    %v2206 = vunpack.c.l.b16 %v2142
    %v2207 = vunpack.c.l.b16 %v2143
    %v2208 = vunpack.c.l.b16 %v2144
    %v2209 = vunpack.c.l.b16 %v2145
    %v2210 = vunpack.c.l.b16 %v2146
    %v2211 = vunpack.c.l.b16 %v2147
    %v2212 = vunpack.c.l.b16 %v2148
    %v2213 = vunpack.c.l.b16 %v2149
    %v2214 = vunpack.c.l.b16 %v2150
    %v2215 = vunpack.c.l.b16 %v2151
    %v2216 = vunpack.c.l.b16 %v2152
    %v2217 = vunpack.c.l.b16 %v2153
    %v2218 = vunpack.c.l.b16 %v2154
    %v2219 = vunpack.c.l.b16 %v2155
    %v2220 = vunpack.c.l.b16 %v2156
    %v2221 = vunpack.c.l.b16 %v2157
    %v2222 = vunpack.c.l.b16 %v2158
    %v2223 = vpack.c.b16 %v2192, %v2191
    %v2224 = vpack.c.b16 %v2194, %v2193
    %v2225 = vpack.c.b16 %v2196, %v2195
    %v2226 = vpack.c.b16 %v2198, %v2197
    %v2227 = vpack.c.b16 %v2200, %v2199
    %v2228 = vpack.c.b16 %v2202, %v2201
    %v2229 = vpack.c.b16 %v2204, %v2203
    %v2230 = vpack.c.b16 %v2206, %v2205
    %v2231 = vpack.c.b16 %v2208, %v2207
    %v2232 = vpack.c.b16 %v2210, %v2209
    %v2233 = vpack.c.b16 %v2212, %v2211
    %v2234 = vpack.c.b16 %v2214, %v2213
    %v2235 = vpack.c.b16 %v2216, %v2215
    %v2236 = vpack.c.b16 %v2218, %v2217
    %v2237 = vpack.c.b16 %v2220, %v2219
    %v2238 = vpack.c.b16 %v2222, %v2221
    %2255 = vmatprep.subr.bf16.mxu0 0
    %2256 = vmatpush1.bf16.msra.mxu0 %v2230
    %2257 = vmatprep.subr.bf16.mxu0 0
    %2258 = vmatpush1.bf16.msra.mxu0 %v2229
    %2259 = vmatprep.subr.bf16.mxu0 0
    %2260 = vmatpush1.bf16.msra.mxu0 %v2228
    %2261 = vmatprep.subr.bf16.mxu0 0
    %2262 = vmatpush1.bf16.msra.mxu0 %v2227
    %2263 = vmatprep.subr.bf16.mxu0 0
    %2264 = vmatpush1.bf16.msra.mxu0 %v2226
    %2265 = vmatprep.subr.bf16.mxu0 0
    %2266 = vmatpush1.bf16.msra.mxu0 %v2225
    %2267 = vmatprep.subr.bf16.mxu0 0
    %2268 = vmatpush1.bf16.msra.mxu0 %v2224
    %2269 = vmatprep.subr.bf16.mxu0 0
    %2270 = vmatpush1.bf16.msra.mxu0 %v2223
    %2271 = vmatprep.subr.bf16.mxu0 0
    %2272 = vmatpush2.bf16.msra.mxu0 %v2238
    %2273 = vmatprep.subr.bf16.mxu0 0
    %2274 = vmatpush2.bf16.msra.mxu0 %v2237
    %2275 = vmatprep.subr.bf16.mxu0 0
    %2276 = vmatpush2.bf16.msra.mxu0 %v2236
    %2277 = vmatprep.subr.bf16.mxu0 0
    %2278 = vmatpush2.bf16.msra.mxu0 %v2235
    %2279 = vmatprep.subr.bf16.mxu0 0
    %2280 = vmatpush2.bf16.msra.mxu0 %v2234
    %2281 = vmatprep.subr.bf16.mxu0 0
    %2282 = vmatpush2.bf16.msra.mxu0 %v2233
    %2283 = vmatprep.subr.bf16.mxu0 0
    %2284 = vmatpush2.bf16.msra.mxu0 %v2232
    %2285 = vmatprep.subr.bf16.mxu0 0
    %2286 = vmatpush2.bf16.msra.mxu0 %v2231
    %2287 = vmatprep.mubr.bf16.mxu0 %v2123
    %2288 = vmatmul.mubr.bf16.gmra.mxu0 %v2122
    %v2289 = vpop.f32.mrf.mxu0
    %v2290 = vadd.f32 0.0, %v2289
    %v2291 = vpop.f32.mrf.mxu0
    %v2292 = vpop.f32.mrf.mxu0
    %v2293 = vadd.f32 0.0, %v2292
    %v2294 = vpop.f32.mrf.mxu0
    %2295 = vmatprep.mubr.bf16.mxu0 %v2125
    %2296 = vmatmul.mubr.bf16.gmra.mxu0 %v2124
    %v2297 = vpop.f32.mrf.mxu0
    %v2298 = vadd.f32 0.0, %v2297
    %v2299 = vpop.f32.mrf.mxu0
    %v2300 = vpop.f32.mrf.mxu0
    %v2301 = vadd.f32 0.0, %v2300
    %v2302 = vpop.f32.mrf.mxu0
    %2303 = vdwg.mxu0
    %v2304 = vadd.f32 %v2051, %v2290
    %v2305 = vadd.f32 %v2054, %v2293
    %v2306 = vadd.f32 %v2059, %v2298
    %v2307 = vadd.f32 %v2062, %v2301
    %v2308 = vld [vmem:[%s11] sm:$0x1]
    %v2310 = vlaneseq
    %v2311 = vshrl.u32 %v2310, 7
    %v2312 = vsub.s32 0, %v2311
    %v2313 = vrot.slane %v2308, %v2312
    %v2315 = vadd.f32 %v2304, %v2313
    %v2316 = vadd.f32 %v2305, %v2313
    %v2317 = vadd.f32 %v2306, %v2313
    %v2318 = vadd.f32 %v2307, %v2313
    %v2319 = vpack.c.bf16 %v2316, %v2315
    %v2320 = vpack.c.bf16 %v2318, %v2317
    %v2321 = vld [vmem:[#allocation6] sm:$0xff]
    %v2322 = vld [vmem:[#allocation6 + $0x8] sm:$0xff]
    %v2323 = vld [vmem:[#allocation6 + $0x10] sm:$0xff]
    %v2324 = vld [vmem:[#allocation6 + $0x18] sm:$0xff]
    %v2325 = vld [vmem:[#allocation6 + $0x20] sm:$0xff]
    %v2326 = vld [vmem:[#allocation6 + $0x28] sm:$0xff]
    %v2327 = vld [vmem:[#allocation6 + $0x30] sm:$0xff]
    %v2328 = vld [vmem:[#allocation6 + $0x38] sm:$0xff]
    %v2329 = vld [vmem:[#allocation6 + $0x40] sm:$0xff]
    %v2330 = vld [vmem:[#allocation6 + $0x48] sm:$0xff]
    %v2331 = vld [vmem:[#allocation6 + $0x50] sm:$0xff]
    %v2332 = vld [vmem:[#allocation6 + $0x58] sm:$0xff]
    %v2333 = vld [vmem:[#allocation6 + $0x60] sm:$0xff]
    %v2334 = vld [vmem:[#allocation6 + $0x68] sm:$0xff]
    %v2335 = vld [vmem:[#allocation6 + $0x70] sm:$0xff]
    %v2336 = vld [vmem:[#allocation6 + $0x78] sm:$0xff]
    %v2337 = vld [vmem:[%s13] sm:$0x3]
    %v2339 = vlaneseq
    %v2340 = vshrl.u32 %v2339, 7
    %v2341 = vsub.s32 0, %v2340
    %v2342 = vrot.slane %v2337, %v2341
    %v2343 = vlaneseq
    %v2344 = vshrl.u32 %v2343, 7
    %v2345 = vsub.s32 1, %v2344
    %v2346 = vrot.slane %v2337, %v2345
    %v2365 = vunpack.c.l.b16 %v2321
    %v2366 = vunpack.c.h.b16 %v2321
    %v2367 = vunpack.c.l.b16 %v2322
    %v2368 = vunpack.c.h.b16 %v2322
    %v2369 = vunpack.c.l.b16 %v2323
    %v2370 = vunpack.c.h.b16 %v2323
    %v2371 = vunpack.c.l.b16 %v2324
    %v2372 = vunpack.c.h.b16 %v2324
    %v2373 = vunpack.c.l.b16 %v2325
    %v2374 = vunpack.c.h.b16 %v2325
    %v2375 = vunpack.c.l.b16 %v2326
    %v2376 = vunpack.c.h.b16 %v2326
    %v2377 = vunpack.c.l.b16 %v2327
    %v2378 = vunpack.c.h.b16 %v2327
    %v2379 = vunpack.c.l.b16 %v2328
    %v2380 = vunpack.c.h.b16 %v2328
    %v2381 = vunpack.c.l.b16 %v2329
    %v2382 = vunpack.c.h.b16 %v2329
    %v2383 = vunpack.c.l.b16 %v2330
    %v2384 = vunpack.c.h.b16 %v2330
    %v2385 = vunpack.c.l.b16 %v2331
    %v2386 = vunpack.c.h.b16 %v2331
    %v2387 = vunpack.c.l.b16 %v2332
    %v2388 = vunpack.c.h.b16 %v2332
    %v2389 = vunpack.c.l.b16 %v2333
    %v2390 = vunpack.c.h.b16 %v2333
    %v2391 = vunpack.c.l.b16 %v2334
    %v2392 = vunpack.c.h.b16 %v2334
    %v2393 = vunpack.c.l.b16 %v2335
    %v2394 = vunpack.c.h.b16 %v2335
    %v2395 = vunpack.c.l.b16 %v2336
    %v2396 = vunpack.c.h.b16 %v2336
    %v2397 = vpack.c.b16 %v2367, %v2365
    %v2398 = vpack.c.b16 %v2368, %v2366
    %v2399 = vpack.c.b16 %v2371, %v2369
    %v2400 = vpack.c.b16 %v2372, %v2370
    %v2401 = vpack.c.b16 %v2375, %v2373
    %v2402 = vpack.c.b16 %v2376, %v2374
    %v2403 = vpack.c.b16 %v2379, %v2377
    %v2404 = vpack.c.b16 %v2380, %v2378
    %v2405 = vpack.c.b16 %v2383, %v2381
    %v2406 = vpack.c.b16 %v2384, %v2382
    %v2407 = vpack.c.b16 %v2387, %v2385
    %v2408 = vpack.c.b16 %v2388, %v2386
    %v2409 = vpack.c.b16 %v2391, %v2389
    %v2410 = vpack.c.b16 %v2392, %v2390
    %v2411 = vpack.c.b16 %v2395, %v2393
    %v2412 = vpack.c.b16 %v2396, %v2394
    %2429 = vmatprep.subr.bf16.mxu0 %v2412
    %2430 = vmatpush1.bf16.msra.mxu0 %v2411
    %2431 = vmatprep.subr.bf16.mxu0 %v2410
    %2432 = vmatpush1.bf16.msra.mxu0 %v2409
    %2433 = vmatprep.subr.bf16.mxu0 %v2408
    %2434 = vmatpush1.bf16.msra.mxu0 %v2407
    %2435 = vmatprep.subr.bf16.mxu0 %v2406
    %2436 = vmatpush1.bf16.msra.mxu0 %v2405
    %2437 = vmatprep.subr.bf16.mxu0 %v2404
    %2438 = vmatpush1.bf16.msra.mxu0 %v2403
    %2439 = vmatprep.subr.bf16.mxu0 %v2402
    %2440 = vmatpush1.bf16.msra.mxu0 %v2401
    %2441 = vmatprep.subr.bf16.mxu0 %v2400
    %2442 = vmatpush1.bf16.msra.mxu0 %v2399
    %2443 = vmatprep.subr.bf16.mxu0 %v2398
    %2444 = vmatpush1.bf16.msra.mxu0 %v2397
    %2445 = vmatprep.subr.bf16.mxu0 0
    %2446 = vmatpush2.bf16.msra.mxu0 0
    %2447 = vmatprep.subr.bf16.mxu0 0
    %2448 = vmatpush2.bf16.msra.mxu0 0
    %2449 = vmatprep.subr.bf16.mxu0 0
    %2450 = vmatpush2.bf16.msra.mxu0 0
    %2451 = vmatprep.subr.bf16.mxu0 0
    %2452 = vmatpush2.bf16.msra.mxu0 0
    %2453 = vmatprep.subr.bf16.mxu0 0
    %2454 = vmatpush2.bf16.msra.mxu0 0
    %2455 = vmatprep.subr.bf16.mxu0 0
    %2456 = vmatpush2.bf16.msra.mxu0 0
    %2457 = vmatprep.subr.bf16.mxu0 0
    %2458 = vmatpush2.bf16.msra.mxu0 0
    %2459 = vmatprep.subr.bf16.mxu0 0
    %2460 = vmatpush2.bf16.msra.mxu0 0
    %2461 = vmatprep.mubr.bf16.mxu0 0
    %2462 = vmatmul.mubr.bf16.gmra.mxu0 %v2319
    %v2463 = vpop.f32.mrf.mxu0
    %v2464 = vadd.f32 %v2342, %v2463
    %v2465 = vpop.f32.mrf.mxu0
    %v2466 = vadd.f32 %v2346, %v2465
    %v2467 = vpop.f32.mrf.mxu0
    %v2468 = vadd.f32 %v2342, %v2467
    %v2469 = vpop.f32.mrf.mxu0
    %v2470 = vadd.f32 %v2346, %v2469
    %2471 = vmatprep.mubr.bf16.mxu0 0
    %2472 = vmatmul.mubr.bf16.gmra.mxu0 %v2320
    %v2473 = vpop.f32.mrf.mxu0
    %v2474 = vadd.f32 %v2342, %v2473
    %v2475 = vpop.f32.mrf.mxu0
    %v2476 = vadd.f32 %v2346, %v2475
    %v2477 = vpop.f32.mrf.mxu0
    %v2478 = vadd.f32 %v2342, %v2477
    %v2479 = vpop.f32.mrf.mxu0
    %v2480 = vadd.f32 %v2346, %v2479
    %2481 = vdwg.mxu0
    %v2482 = vxor.u32 %v2464, 2147483648
    %v2483 = vxor.u32 %v2466, 2147483648
    %v2484 = vxor.u32 %v2468, 2147483648
    %v2485 = vxor.u32 %v2470, 2147483648
    %v2486 = vxor.u32 %v2474, 2147483648
    %v2487 = vxor.u32 %v2476, 2147483648
    %v2488 = vxor.u32 %v2478, 2147483648
    %v2489 = vxor.u32 %v2480, 2147483648
    %v2490 = vmul.f32 %v2482, 1.442695
    %v2491 = vpow.pop %v2490
    %v2492 = vmul.f32 %v2483, 1.442695
    %v2493 = vpow.pop %v2492
    %v2494 = vmul.f32 %v2484, 1.442695
    %v2495 = vpow.pop %v2494
    %v2496 = vmul.f32 %v2485, 1.442695
    %v2497 = vpow.pop %v2496
    %v2498 = vmul.f32 %v2486, 1.442695
    %v2499 = vpow.pop %v2498
    %v2500 = vmul.f32 %v2487, 1.442695
    %v2501 = vpow.pop %v2500
    %v2502 = vmul.f32 %v2488, 1.442695
    %v2503 = vpow.pop %v2502
    %v2504 = vmul.f32 %v2489, 1.442695
    %v2505 = vpow.pop %v2504
    %v2506 = vadd.f32 %v2491, 1.0
    %v2507 = vadd.f32 %v2493, 1.0
    %v2508 = vadd.f32 %v2495, 1.0
    %v2509 = vadd.f32 %v2497, 1.0
    %v2510 = vadd.f32 %v2499, 1.0
    %v2511 = vadd.f32 %v2501, 1.0
    %v2512 = vadd.f32 %v2503, 1.0
    %v2513 = vadd.f32 %v2505, 1.0
    %v2514 = vrcp.pop %v2506
    %v2515 = vmul.f32 1.0, %v2514
    %v2516 = vrcp.pop %v2507
    %v2517 = vmul.f32 1.0, %v2516
    %v2518 = vrcp.pop %v2508
    %v2519 = vmul.f32 1.0, %v2518
    %v2520 = vrcp.pop %v2509
    %v2521 = vmul.f32 1.0, %v2520
    %v2522 = vrcp.pop %v2510
    %v2523 = vmul.f32 1.0, %v2522
    %v2524 = vrcp.pop %v2511
    %v2525 = vmul.f32 1.0, %v2524
    %v2526 = vrcp.pop %v2512
    %v2527 = vmul.f32 1.0, %v2526
    %v2528 = vrcp.pop %v2513
    %v2529 = vmul.f32 1.0, %v2528
    %v2530 = vmul.f32 %v1637, %v2515
    %v2531 = vmul.f32 %v1638, %v2517
    %v2532 = vmul.f32 %v1639, %v2519
    %v2533 = vmul.f32 %v1640, %v2521
    %v2534 = vmul.f32 %v1641, %v2523
    %v2535 = vmul.f32 %v1642, %v2525
    %v2536 = vmul.f32 %v1643, %v2527
    %v2537 = vmul.f32 %v1644, %v2529
    %v2538 = vpack.c.bf16 %v2532, %v2530
    %v2539 = vpack.c.bf16 %v2533, %v2531
    %v2540 = vpack.c.bf16 %v2536, %v2534
    %v2541 = vpack.c.bf16 %v2537, %v2535
    %v2542 = vld [vmem:[#allocation7] sm:$0xf]
    %v2543 = vld [vmem:[#allocation7 + $0x4] sm:$0xf]
    %v2544 = vld [vmem:[#allocation7 + $0x8] sm:$0xf]
    %v2545 = vld [vmem:[#allocation7 + $0xc] sm:$0xf]
    %v2546 = vld [vmem:[#allocation7 + $0x10] sm:$0xf]
    %v2547 = vld [vmem:[#allocation7 + $0x14] sm:$0xf]
    %v2548 = vld [vmem:[#allocation7 + $0x18] sm:$0xf]
    %v2549 = vld [vmem:[#allocation7 + $0x1c] sm:$0xf]
    %v2550 = vld [vmem:[#allocation7 + $0x20] sm:$0xf]
    %v2551 = vld [vmem:[#allocation7 + $0x24] sm:$0xf]
    %v2552 = vld [vmem:[#allocation7 + $0x28] sm:$0xf]
    %v2553 = vld [vmem:[#allocation7 + $0x2c] sm:$0xf]
    %v2554 = vld [vmem:[#allocation7 + $0x30] sm:$0xf]
    %v2555 = vld [vmem:[#allocation7 + $0x34] sm:$0xf]
    %v2556 = vld [vmem:[#allocation7 + $0x38] sm:$0xf]
    %v2557 = vld [vmem:[#allocation7 + $0x3c] sm:$0xf]
    %v2558 = vld [vmem:[#allocation7 + $0x40] sm:$0xf]
    %v2559 = vld [vmem:[#allocation7 + $0x44] sm:$0xf]
    %v2560 = vld [vmem:[#allocation7 + $0x48] sm:$0xf]
    %v2561 = vld [vmem:[#allocation7 + $0x4c] sm:$0xf]
    %v2562 = vld [vmem:[#allocation7 + $0x50] sm:$0xf]
    %v2563 = vld [vmem:[#allocation7 + $0x54] sm:$0xf]
    %v2564 = vld [vmem:[#allocation7 + $0x58] sm:$0xf]
    %v2565 = vld [vmem:[#allocation7 + $0x5c] sm:$0xf]
    %v2566 = vld [vmem:[#allocation7 + $0x60] sm:$0xf]
    %v2567 = vld [vmem:[#allocation7 + $0x64] sm:$0xf]
    %v2568 = vld [vmem:[#allocation7 + $0x68] sm:$0xf]
    %v2569 = vld [vmem:[#allocation7 + $0x6c] sm:$0xf]
    %v2570 = vld [vmem:[#allocation7 + $0x70] sm:$0xf]
    %v2571 = vld [vmem:[#allocation7 + $0x74] sm:$0xf]
    %v2572 = vld [vmem:[#allocation7 + $0x78] sm:$0xf]
    %v2573 = vld [vmem:[#allocation7 + $0x7c] sm:$0xf]
    %v2574 = vld [vmem:[%s15] sm:$0xf]
    %v2575 = vld [vmem:[%s15 + $0x4] sm:$0xf]
    %v2576 = vld [vmem:[%s15 + $0x8] sm:$0xf]
    %v2577 = vld [vmem:[%s15 + $0xc] sm:$0xf]
    %v2578 = vld [vmem:[%s15 + $0x10] sm:$0xf]
    %v2579 = vld [vmem:[%s15 + $0x14] sm:$0xf]
    %v2580 = vld [vmem:[%s15 + $0x18] sm:$0xf]
    %v2581 = vld [vmem:[%s15 + $0x1c] sm:$0xf]
    %v2582 = vld [vmem:[%s15 + $0x20] sm:$0xf]
    %v2583 = vld [vmem:[%s15 + $0x24] sm:$0xf]
    %v2584 = vld [vmem:[%s15 + $0x28] sm:$0xf]
    %v2585 = vld [vmem:[%s15 + $0x2c] sm:$0xf]
    %v2586 = vld [vmem:[%s15 + $0x30] sm:$0xf]
    %v2587 = vld [vmem:[%s15 + $0x34] sm:$0xf]
    %v2588 = vld [vmem:[%s15 + $0x38] sm:$0xf]
    %v2589 = vld [vmem:[%s15 + $0x3c] sm:$0xf]
    %v2606 = vunpack.c.l.b16 %v2574
    %v2607 = vunpack.c.l.b16 %v2575
    %v2608 = vunpack.c.l.b16 %v2576
    %v2609 = vunpack.c.l.b16 %v2577
    %v2610 = vunpack.c.l.b16 %v2578
    %v2611 = vunpack.c.l.b16 %v2579
    %v2612 = vunpack.c.l.b16 %v2580
    %v2613 = vunpack.c.l.b16 %v2581
    %v2614 = vunpack.c.l.b16 %v2582
    %v2615 = vunpack.c.l.b16 %v2583
    %v2616 = vunpack.c.l.b16 %v2584
    %v2617 = vunpack.c.l.b16 %v2585
    %v2618 = vunpack.c.l.b16 %v2586
    %v2619 = vunpack.c.l.b16 %v2587
    %v2620 = vunpack.c.l.b16 %v2588
    %v2621 = vunpack.c.l.b16 %v2589
    %v2622 = vpack.c.b16 %v2607, %v2606
    %v2623 = vpack.c.b16 %v2609, %v2608
    %v2624 = vpack.c.b16 %v2611, %v2610
    %v2625 = vpack.c.b16 %v2613, %v2612
    %v2626 = vpack.c.b16 %v2615, %v2614
    %v2627 = vpack.c.b16 %v2617, %v2616
    %v2628 = vpack.c.b16 %v2619, %v2618
    %v2629 = vpack.c.b16 %v2621, %v2620
    %2638 = vmatprep.subr.bf16.mxu0 0
    %2639 = vmatpush1.bf16.msra.mxu0 %v2629
    %2640 = vmatprep.subr.bf16.mxu0 0
    %2641 = vmatpush1.bf16.msra.mxu0 %v2628
    %2642 = vmatprep.subr.bf16.mxu0 0
    %2643 = vmatpush1.bf16.msra.mxu0 %v2627
    %2644 = vmatprep.subr.bf16.mxu0 0
    %2645 = vmatpush1.bf16.msra.mxu0 %v2626
    %2646 = vmatprep.subr.bf16.mxu0 0
    %2647 = vmatpush1.bf16.msra.mxu0 %v2625
    %2648 = vmatprep.subr.bf16.mxu0 0
    %2649 = vmatpush1.bf16.msra.mxu0 %v2624
    %2650 = vmatprep.subr.bf16.mxu0 0
    %2651 = vmatpush1.bf16.msra.mxu0 %v2623
    %2652 = vmatprep.subr.bf16.mxu0 0
    %2653 = vmatpush1.bf16.msra.mxu0 %v2622
    %2654 = vmatprep.subr.bf16.mxu0 0
    %2655 = vmatpush2.bf16.msra.mxu0 0
    %2656 = vmatprep.subr.bf16.mxu0 0
    %2657 = vmatpush2.bf16.msra.mxu0 0
    %2658 = vmatprep.subr.bf16.mxu0 0
    %2659 = vmatpush2.bf16.msra.mxu0 0
    %2660 = vmatprep.subr.bf16.mxu0 0
    %2661 = vmatpush2.bf16.msra.mxu0 0
    %2662 = vmatprep.subr.bf16.mxu0 0
    %2663 = vmatpush2.bf16.msra.mxu0 0
    %2664 = vmatprep.subr.bf16.mxu0 0
    %2665 = vmatpush2.bf16.msra.mxu0 0
    %2666 = vmatprep.subr.bf16.mxu0 0
    %2667 = vmatpush2.bf16.msra.mxu0 0
    %2668 = vmatprep.subr.bf16.mxu0 0
    %2669 = vmatpush2.bf16.msra.mxu0 0
    %2670 = vmatprep.mubr.bf16.mxu0 0
    %2671 = vmatmul.mubr.bf16.gmra.mxu0 %v116
    %v2672 = vpop.f32.mrf.mxu0
    %v2673 = vadd.f32 0.0, %v2672
    %v2674 = vpop.f32.mrf.mxu0
    %v2675 = vpop.f32.mrf.mxu0
    %v2676 = vadd.f32 0.0, %v2675
    %v2677 = vpop.f32.mrf.mxu0
    %2678 = vmatprep.mubr.bf16.mxu0 0
    %2679 = vmatmul.mubr.bf16.gmra.mxu0 %v117
    %v2680 = vpop.f32.mrf.mxu0
    %v2681 = vadd.f32 0.0, %v2680
    %v2682 = vpop.f32.mrf.mxu0
    %v2683 = vpop.f32.mrf.mxu0
    %v2684 = vadd.f32 0.0, %v2683
    %v2685 = vpop.f32.mrf.mxu0
    %2686 = vdwg.mxu0
    %v2719 = vunpack.c.l.b16 %v2542
    %v2720 = vunpack.c.l.b16 %v2543
    %v2721 = vunpack.c.l.b16 %v2544
    %v2722 = vunpack.c.l.b16 %v2545
    %v2723 = vunpack.c.l.b16 %v2546
    %v2724 = vunpack.c.l.b16 %v2547
    %v2725 = vunpack.c.l.b16 %v2548
    %v2726 = vunpack.c.l.b16 %v2549
    %v2727 = vunpack.c.l.b16 %v2550
    %v2728 = vunpack.c.l.b16 %v2551
    %v2729 = vunpack.c.l.b16 %v2552
    %v2730 = vunpack.c.l.b16 %v2553
    %v2731 = vunpack.c.l.b16 %v2554
    %v2732 = vunpack.c.l.b16 %v2555
    %v2733 = vunpack.c.l.b16 %v2556
    %v2734 = vunpack.c.l.b16 %v2557
    %v2735 = vunpack.c.l.b16 %v2558
    %v2736 = vunpack.c.l.b16 %v2559
    %v2737 = vunpack.c.l.b16 %v2560
    %v2738 = vunpack.c.l.b16 %v2561
    %v2739 = vunpack.c.l.b16 %v2562
    %v2740 = vunpack.c.l.b16 %v2563
    %v2741 = vunpack.c.l.b16 %v2564
    %v2742 = vunpack.c.l.b16 %v2565
    %v2743 = vunpack.c.l.b16 %v2566
    %v2744 = vunpack.c.l.b16 %v2567
    %v2745 = vunpack.c.l.b16 %v2568
    %v2746 = vunpack.c.l.b16 %v2569
    %v2747 = vunpack.c.l.b16 %v2570
    %v2748 = vunpack.c.l.b16 %v2571
    %v2749 = vunpack.c.l.b16 %v2572
    %v2750 = vunpack.c.l.b16 %v2573
    %v2751 = vpack.c.b16 %v2720, %v2719
    %v2752 = vpack.c.b16 %v2722, %v2721
    %v2753 = vpack.c.b16 %v2724, %v2723
    %v2754 = vpack.c.b16 %v2726, %v2725
    %v2755 = vpack.c.b16 %v2728, %v2727
    %v2756 = vpack.c.b16 %v2730, %v2729
    %v2757 = vpack.c.b16 %v2732, %v2731
    %v2758 = vpack.c.b16 %v2734, %v2733
    %v2759 = vpack.c.b16 %v2736, %v2735
    %v2760 = vpack.c.b16 %v2738, %v2737
    %v2761 = vpack.c.b16 %v2740, %v2739
    %v2762 = vpack.c.b16 %v2742, %v2741
    %v2763 = vpack.c.b16 %v2744, %v2743
    %v2764 = vpack.c.b16 %v2746, %v2745
    %v2765 = vpack.c.b16 %v2748, %v2747
    %v2766 = vpack.c.b16 %v2750, %v2749
    %2783 = vmatprep.subr.bf16.mxu0 0
    %2784 = vmatpush1.bf16.msra.mxu0 %v2758
    %2785 = vmatprep.subr.bf16.mxu0 0
    %2786 = vmatpush1.bf16.msra.mxu0 %v2757
    %2787 = vmatprep.subr.bf16.mxu0 0
    %2788 = vmatpush1.bf16.msra.mxu0 %v2756
    %2789 = vmatprep.subr.bf16.mxu0 0
    %2790 = vmatpush1.bf16.msra.mxu0 %v2755
    %2791 = vmatprep.subr.bf16.mxu0 0
    %2792 = vmatpush1.bf16.msra.mxu0 %v2754
    %2793 = vmatprep.subr.bf16.mxu0 0
    %2794 = vmatpush1.bf16.msra.mxu0 %v2753
    %2795 = vmatprep.subr.bf16.mxu0 0
    %2796 = vmatpush1.bf16.msra.mxu0 %v2752
    %2797 = vmatprep.subr.bf16.mxu0 0
    %2798 = vmatpush1.bf16.msra.mxu0 %v2751
    %2799 = vmatprep.subr.bf16.mxu0 0
    %2800 = vmatpush2.bf16.msra.mxu0 %v2766
    %2801 = vmatprep.subr.bf16.mxu0 0
    %2802 = vmatpush2.bf16.msra.mxu0 %v2765
    %2803 = vmatprep.subr.bf16.mxu0 0
    %2804 = vmatpush2.bf16.msra.mxu0 %v2764
    %2805 = vmatprep.subr.bf16.mxu0 0
    %2806 = vmatpush2.bf16.msra.mxu0 %v2763
    %2807 = vmatprep.subr.bf16.mxu0 0
    %2808 = vmatpush2.bf16.msra.mxu0 %v2762
    %2809 = vmatprep.subr.bf16.mxu0 0
    %2810 = vmatpush2.bf16.msra.mxu0 %v2761
    %2811 = vmatprep.subr.bf16.mxu0 0
    %2812 = vmatpush2.bf16.msra.mxu0 %v2760
    %2813 = vmatprep.subr.bf16.mxu0 0
    %2814 = vmatpush2.bf16.msra.mxu0 %v2759
    %2815 = vmatprep.mubr.bf16.mxu0 %v2539
    %2816 = vmatmul.mubr.bf16.gmra.mxu0 %v2538
    %v2817 = vpop.f32.mrf.mxu0
    %v2818 = vadd.f32 %v2673, %v2817
    %v2819 = vpop.f32.mrf.mxu0
    %v2820 = vpop.f32.mrf.mxu0
    %v2821 = vadd.f32 %v2676, %v2820
    %v2822 = vpop.f32.mrf.mxu0
    %2823 = vmatprep.mubr.bf16.mxu0 %v2541
    %2824 = vmatmul.mubr.bf16.gmra.mxu0 %v2540
    %v2825 = vpop.f32.mrf.mxu0
    %v2826 = vadd.f32 %v2681, %v2825
    %v2827 = vpop.f32.mrf.mxu0
    %v2828 = vpop.f32.mrf.mxu0
    %v2829 = vadd.f32 %v2684, %v2828
    %v2830 = vpop.f32.mrf.mxu0
    %2831 = vdwg.mxu0
    %v2832 = vld [vmem:[%s16] sm:$0x1]
    %v2834 = vlaneseq
    %v2835 = vshrl.u32 %v2834, 7
    %v2836 = vsub.s32 0, %v2835
    %v2837 = vrot.slane %v2832, %v2836
    %v2839 = vadd.f32 %v2818, %v2837
    %v2840 = vadd.f32 %v2821, %v2837
    %v2841 = vadd.f32 %v2826, %v2837
    %v2842 = vadd.f32 %v2829, %v2837
    %2843 = vst [vmem:[%s17] sm:$0xff] %v2839
    %2844 = vst [vmem:[%s17 + $0x8] sm:$0xff] %v2840
    %2845 = vst [vmem:[%s17 + $0x10] sm:$0xff] %v2841
    %2846 = vst [vmem:[%s17 + $0x18] sm:$0xff] %v2842
    // Predicated region
    $region86: #{recombination_block.1} parent=1 // pred_check
      _
    $region87: #{recombination_block.1} parent=1 // pred_check_branch
      %2848 = sbr.rel (0) target = $region89
    $region88: #{recombination_block.1} parent=1 // pred_region
      _
    $region89: #{recombination_block.1} parent=1 // pred_fallthru
      _
    // Predicated region
    $region90: #{recombination_block.1} parent=1 // pred_check
      _
    $region91: #{recombination_block.1} parent=1 // pred_check_branch
      %2850 = sbr.rel (0) target = $region93
    $region92: #{recombination_block.1} parent=1 // pred_region
      _
    $region93: #{recombination_block.1} parent=1 // pred_fallthru
      _
    %2851 = vsyncpa [#allocation3], 1
    %2852 = vsyncpa [#allocation5], 1
    %2853 = vsyncpa [#allocation8], 1

</llo_original>
